<compile_context>
chip_gen: v7x
topology: tpu7x:2x2x1
jax: 0.10.0
libtpu: 0.0.40
codegen_flags: <defaults>
</compile_context>

<pallas_src>
import functools

import jax
import jax.numpy as jnp
from jax.experimental import pallas as pl
from jax.experimental.pallas import tpu as pltpu

LANE = 128
SUBLANE = 8


# ----------------------------------------------------------------------------
# Pallas kernel: one batch tile per grid step, weights fully VMEM-resident.
# ----------------------------------------------------------------------------
def _lae_eval_kernel(x_ref, eps_ref,
                     w1_ref, b1_ref,   # encoder layer 1  (D  -> Hp)   bf16/f32
                     w2_ref, b2_ref,   # encoder layer 2  (Hp -> Zp)   == fi
                     w3_ref, b3_ref,   # decoder layer 1  (Zp -> Hp)
                     w4_ref, b4_ref,   # decoder layer 2  (Hp -> D)
                     out_ref, part_ref,
                     *, batch_valid, tile_b):
    i = pl.program_id(0)

    x = x_ref[...]                                            # (TB, D)  f32
    eps = eps_ref[...]                                        # (TB, Zp) f32

    # ---- encoder: mu = encoder(x) ----  (bf16 MXU inputs, f32 accumulate)
    h = jnp.tanh(
        jnp.dot(x.astype(jnp.bfloat16), w1_ref[...],
                preferred_element_type=jnp.float32) + b1_ref[...])      # (TB, Hp)
    mu = (jnp.dot(h.astype(jnp.bfloat16), w2_ref[...],
                  preferred_element_type=jnp.float32) + b2_ref[...])    # (TB, Zp)

    # ---- z ~ Normal(mu, 0.05)  (reparameterized with pre-drawn eps) ----
    z = mu + jnp.float32(0.05) * eps                                    # (TB, Zp)

    # ---- decoder ----
    hd = jnp.tanh(
        jnp.dot(z.astype(jnp.bfloat16), w3_ref[...],
                preferred_element_type=jnp.float32) + b3_ref[...])      # (TB, Hp)
    out = (jnp.dot(hd.astype(jnp.bfloat16), w4_ref[...],
                   preferred_element_type=jnp.float32) + b4_ref[...])   # (TB, D)

    # ---- valid-row mask for padded batch rows ----
    row = jax.lax.broadcasted_iota(jnp.int32, (tile_b, 1), 0) + i * tile_b
    valid = (row < batch_valid).astype(jnp.float32)                     # (TB, 1)

    # ---- energy loss on pre-activation output (partial sum for this tile) ----
    diff = (out - x) * valid
    e_part = jnp.sum(diff * diff)

    # ---- out_activation = sigmoid (via single tanh EUP push) ----
    out_act = jnp.float32(0.5) * jnp.tanh(jnp.float32(0.5) * out) + jnp.float32(0.5)
    out_ref[...] = out_act

    # ---- reconstruction MSE partial sum on post-activation output ----
    d2 = (out_act - x) * valid
    r_part = jnp.sum(d2 * d2)

    # ---- pack both partial sums into one dense (1, 8, 128) tile ----
    sub = jax.lax.broadcasted_iota(jnp.int32, (1, SUBLANE, LANE), 1)
    lane = jax.lax.broadcasted_iota(jnp.int32, (1, SUBLANE, LANE), 2)
    part_ref[...] = jnp.where(
        (sub == 0) & (lane == 0), e_part,
        jnp.where((sub == 0) & (lane == 1), r_part, jnp.float32(0.0)))


# ----------------------------------------------------------------------------
# Wrapper: pad batch to sublane multiple, call pallas_call, reduce partials.
# Weights arrive already transposed / padded / bf16 (done once in make_params).
# ----------------------------------------------------------------------------
def lae_forward(x_nchw, eps, params, *, tile_b=SUBLANE):
    B = x_nchw.shape[0]
    D = x_nchw.shape[1] * x_nchw.shape[2] * x_nchw.shape[3]
    (w1, b1, w2, b2, w3, b3, w4, b4) = params
    Zp = w2.shape[1]
    assert w1.shape[0] == D and w4.shape[1] == D

    nb = pl.cdiv(B, tile_b)
    b_pad = nb * tile_b

    x_flat = x_nchw.reshape(B, D).astype(jnp.float32)
    x_p = jnp.pad(x_flat, ((0, b_pad - B), (0, 0)))
    eps_p = jnp.pad(eps.astype(jnp.float32),
                    ((0, b_pad - B), (0, Zp - eps.shape[1])))

    kernel = functools.partial(_lae_eval_kernel, batch_valid=B, tile_b=tile_b)

    def full_spec(a):
        return pl.BlockSpec(a.shape, lambda i, _nd=a.ndim: (0,) * _nd)

    out_p, partials = pl.pallas_call(
        kernel,
        out_shape=(
            jax.ShapeDtypeStruct((b_pad, D), jnp.float32),
            jax.ShapeDtypeStruct((nb, SUBLANE, LANE), jnp.float32),
        ),
        grid=(nb,),
        in_specs=[
            pl.BlockSpec((tile_b, D), lambda i: (i, 0)),     # x tile
            pl.BlockSpec((tile_b, Zp), lambda i: (i, 0)),    # eps tile
            full_spec(w1), full_spec(b1),
            full_spec(w2), full_spec(b2),
            full_spec(w3), full_spec(b3),
            full_spec(w4), full_spec(b4),
        ],
        out_specs=(
            pl.BlockSpec((tile_b, D), lambda i: (i, 0)),
            pl.BlockSpec((1, SUBLANE, LANE), lambda i: (i, 0, 0)),
        ),
        compiler_params=pltpu.CompilerParams(
            dimension_semantics=("parallel",)),
    )(x_p, eps_p, w1, b1, w2, b2, w3, b3, w4, b4)

    out = out_p[:B].reshape(x_nchw.shape)
    loss = jnp.sum(partials[:, 0, 0]) / jnp.float32(B)
    recon = jnp.sum(partials[:, 0, 1]) / jnp.float32(B * D)
    return {"output": out, "loss": loss, "reconstruction_loss": recon}


# ----------------------------------------------------------------------------
# Deterministic parameter construction (mimics nn.init.orthogonal_ + zero bias).
# Transpose to (in, out), zero-pad hidden/latent dims to 128 lanes, cast to
# bf16 — all done ONCE here, never on the per-call path.
# ----------------------------------------------------------------------------
def orthogonal_init(key, out_dim, in_dim):
    big, small = max(out_dim, in_dim), min(out_dim, in_dim)
    a = jax.random.normal(key, (big, small), dtype=jnp.float32)
    q, r = jnp.linalg.qr(a)
    q = q * jnp.sign(jnp.diagonal(r))[None, :]
    if out_dim < in_dim:
        q = q.T
    return q[:out_dim, :in_dim].astype(jnp.float32)


def make_params(key, D, H, Z, Hp=LANE, Zp=LANE):
    k1, k2, k3, k4 = jax.random.split(key, 4)
    w1 = orthogonal_init(k1, H, D)   # encoder layer 1     (H, D)
    w2 = orthogonal_init(k2, Z, H)   # encoder layer 2 fi  (Z, H)
    w3 = orthogonal_init(k3, H, Z)   # decoder layer 1     (H, Z)
    w4 = orthogonal_init(k4, D, H)   # decoder layer 2     (D, H)

    def prep(w, in_pad, out_pad):
        wt = w.T                                    # (in, out)
        wt = jnp.pad(wt, ((0, in_pad - wt.shape[0]),
                          (0, out_pad - wt.shape[1])))
        return wt.astype(jnp.bfloat16)

    w1p = prep(w1, D, Hp)    # (D,  Hp)
    w2p = prep(w2, Hp, Zp)   # (Hp, Zp)
    w3p = prep(w3, Zp, Hp)   # (Zp, Hp)
    w4p = prep(w4, Hp, D)    # (Hp, D)
    b1 = jnp.zeros((1, Hp), jnp.float32)
    b2 = jnp.zeros((1, Zp), jnp.float32)
    b3 = jnp.zeros((1, Hp), jnp.float32)
    b4 = jnp.zeros((1, D), jnp.float32)
    return (w1p, b1, w2p, b2, w3p, b3, w4p, b4)


if __name__ == "__main__":
    # small shapes: batch=2, channels=4, spatial=16x16 -> D=1024, H=64, Z=16
    B, C, Hs, Ws = 2, 4, 16, 16
    D = C * Hs * Ws
    H, Z = 64, 16

    key = jax.random.PRNGKey(0)
    kx, keps, kp = jax.random.split(key, 3)
    x = jax.random.normal(kx, (B, C, Hs, Ws), dtype=jnp.float32)
    eps = jax.random.normal(keps, (B, Z), dtype=jnp.float32)
    params = make_params(kp, D, H, Z)

    result = lae_forward(x, eps, params)
    jax.block_until_ready(result)

    assert result["output"].shape == (B, C, Hs, Ws)
    assert bool(jnp.isfinite(result["loss"]))
    assert bool(jnp.isfinite(result["reconstruction_loss"]))
    assert bool(jnp.all(jnp.isfinite(result["output"])))
    print("KERNEL_OK")
</pallas_src>

<mosaic_0001>
module attributes {stable_mosaic.version = 11 : i64} {
  func.func @_lae_eval_kernel(%arg0: i32, %arg1: memref<8x1024xf32, #tpu.memory_space<vmem>>, %arg2: memref<8x128xf32, #tpu.memory_space<vmem>>, %arg3: memref<1024x128xbf16, #tpu.memory_space<vmem>>, %arg4: memref<1x128xf32, #tpu.memory_space<vmem>>, %arg5: memref<128x128xbf16, #tpu.memory_space<vmem>>, %arg6: memref<1x128xf32, #tpu.memory_space<vmem>>, %arg7: memref<128x128xbf16, #tpu.memory_space<vmem>>, %arg8: memref<1x128xf32, #tpu.memory_space<vmem>>, %arg9: memref<128x1024xbf16, #tpu.memory_space<vmem>>, %arg10: memref<1x1024xf32, #tpu.memory_space<vmem>>, %arg11: memref<8x1024xf32, #tpu.memory_space<vmem>>, %arg12: memref<1x8x128xf32, #tpu.memory_space<vmem>>) attributes {dimension_semantics = [#tpu.dimension_semantics<parallel>], iteration_bounds = array<i64: 1>, scalar_prefetch = 0 : i64, scratch_operands = 0 : i64, tpu.core_type = #tpu.core_type<tc>, window_params = [{transform_indices = @transform_0, window_bounds = array<i64: 8, 1024>}, {transform_indices = @transform_1, window_bounds = array<i64: 8, 128>}, {pipeline_mode = #tpu.pipeline_mode<synchronous>, transform_indices = @transform_2, window_bounds = array<i64: 1024, 128>}, {pipeline_mode = #tpu.pipeline_mode<synchronous>, transform_indices = @transform_3, window_bounds = array<i64: 1, 128>}, {pipeline_mode = #tpu.pipeline_mode<synchronous>, transform_indices = @transform_4, window_bounds = array<i64: 128, 128>}, {pipeline_mode = #tpu.pipeline_mode<synchronous>, transform_indices = @transform_5, window_bounds = array<i64: 1, 128>}, {pipeline_mode = #tpu.pipeline_mode<synchronous>, transform_indices = @transform_6, window_bounds = array<i64: 128, 128>}, {pipeline_mode = #tpu.pipeline_mode<synchronous>, transform_indices = @transform_7, window_bounds = array<i64: 1, 128>}, {pipeline_mode = #tpu.pipeline_mode<synchronous>, transform_indices = @transform_8, window_bounds = array<i64: 128, 1024>}, {pipeline_mode = #tpu.pipeline_mode<synchronous>, transform_indices = @transform_9, window_bounds = array<i64: 1, 1024>}, {transform_indices = @transform_10, window_bounds = array<i64: 8, 1024>}, {transform_indices = @transform_11, window_bounds = array<i64: 1, 8, 128>}]} {
    %c0 = arith.constant 0 : index
    %c0_0 = arith.constant 0 : index
    %0 = vector.load %arg1[%c0, %c0_0] : memref<8x1024xf32, #tpu.memory_space<vmem>>, vector<8x1024xf32>
    %c0_1 = arith.constant 0 : index
    %c0_2 = arith.constant 0 : index
    %1 = vector.load %arg2[%c0_1, %c0_2] : memref<8x128xf32, #tpu.memory_space<vmem>>, vector<8x128xf32>
    %2 = arith.truncf %0 : vector<8x1024xf32> to vector<8x1024xbf16>
    %c0_3 = arith.constant 0 : index
    %c0_4 = arith.constant 0 : index
    %3 = vector.load %arg3[%c0_3, %c0_4] : memref<1024x128xbf16, #tpu.memory_space<vmem>>, vector<1024x128xbf16>
    %cst = arith.constant dense<0.000000e+00> : vector<8x128xf32>
    %4 = tpu.matmul %2, %3, %cst {dimension_numbers = #tpu.dot_dimension_numbers<[1], [0], [0], [1], [0, 0, 1, 1], [], []>} : vector<8x1024xbf16>, vector<1024x128xbf16>, vector<8x128xf32> -> vector<8x128xf32>
    %c0_5 = arith.constant 0 : index
    %c0_6 = arith.constant 0 : index
    %5 = vector.load %arg4[%c0_5, %c0_6] : memref<1x128xf32, #tpu.memory_space<vmem>>, vector<1x128xf32>
    %6 = vector.broadcast %5 : vector<1x128xf32> to vector<8x128xf32>
    %7 = arith.addf %4, %6 : vector<8x128xf32>
    %8 = math.tanh %7 : vector<8x128xf32>
    %9 = arith.truncf %8 : vector<8x128xf32> to vector<8x128xbf16>
    %c0_7 = arith.constant 0 : index
    %c0_8 = arith.constant 0 : index
    %10 = vector.load %arg5[%c0_7, %c0_8] : memref<128x128xbf16, #tpu.memory_space<vmem>>, vector<128x128xbf16>
    %cst_9 = arith.constant dense<0.000000e+00> : vector<8x128xf32>
    %11 = tpu.matmul %9, %10, %cst_9 {dimension_numbers = #tpu.dot_dimension_numbers<[1], [0], [0], [1], [0, 0, 1, 1], [], []>} : vector<8x128xbf16>, vector<128x128xbf16>, vector<8x128xf32> -> vector<8x128xf32>
    %c0_10 = arith.constant 0 : index
    %c0_11 = arith.constant 0 : index
    %12 = vector.load %arg6[%c0_10, %c0_11] : memref<1x128xf32, #tpu.memory_space<vmem>>, vector<1x128xf32>
    %13 = vector.broadcast %12 : vector<1x128xf32> to vector<8x128xf32>
    %14 = arith.addf %11, %13 : vector<8x128xf32>
    %cst_12 = arith.constant 5.000000e-02 : f32
    %15 = vector.broadcast %cst_12 : f32 to vector<8x128xf32>
    %16 = arith.mulf %15, %1 : vector<8x128xf32>
    %17 = arith.addf %14, %16 : vector<8x128xf32>
    %18 = arith.truncf %17 : vector<8x128xf32> to vector<8x128xbf16>
    %c0_13 = arith.constant 0 : index
    %c0_14 = arith.constant 0 : index
    %19 = vector.load %arg7[%c0_13, %c0_14] : memref<128x128xbf16, #tpu.memory_space<vmem>>, vector<128x128xbf16>
    %cst_15 = arith.constant dense<0.000000e+00> : vector<8x128xf32>
    %20 = tpu.matmul %18, %19, %cst_15 {dimension_numbers = #tpu.dot_dimension_numbers<[1], [0], [0], [1], [0, 0, 1, 1], [], []>} : vector<8x128xbf16>, vector<128x128xbf16>, vector<8x128xf32> -> vector<8x128xf32>
    %c0_16 = arith.constant 0 : index
    %c0_17 = arith.constant 0 : index
    %21 = vector.load %arg8[%c0_16, %c0_17] : memref<1x128xf32, #tpu.memory_space<vmem>>, vector<1x128xf32>
    %22 = vector.broadcast %21 : vector<1x128xf32> to vector<8x128xf32>
    %23 = arith.addf %20, %22 : vector<8x128xf32>
    %24 = math.tanh %23 : vector<8x128xf32>
    %25 = arith.truncf %24 : vector<8x128xf32> to vector<8x128xbf16>
    %c0_18 = arith.constant 0 : index
    %c0_19 = arith.constant 0 : index
    %26 = vector.load %arg9[%c0_18, %c0_19] : memref<128x1024xbf16, #tpu.memory_space<vmem>>, vector<128x1024xbf16>
    %cst_20 = arith.constant dense<0.000000e+00> : vector<8x1024xf32>
    %27 = tpu.matmul %25, %26, %cst_20 {dimension_numbers = #tpu.dot_dimension_numbers<[1], [0], [0], [1], [0, 0, 1, 1], [], []>} : vector<8x128xbf16>, vector<128x1024xbf16>, vector<8x1024xf32> -> vector<8x1024xf32>
    %c0_21 = arith.constant 0 : index
    %c0_22 = arith.constant 0 : index
    %28 = vector.load %arg10[%c0_21, %c0_22] : memref<1x1024xf32, #tpu.memory_space<vmem>>, vector<1x1024xf32>
    %29 = vector.broadcast %28 : vector<1x1024xf32> to vector<8x1024xf32>
    %30 = arith.addf %27, %29 : vector<8x1024xf32>
    %31 = tpu.iota {dimensions = array<i32: 0>} : vector<8x1xi32>
    %c8_i32 = arith.constant 8 : i32
    %32 = arith.muli %arg0, %c8_i32 : i32
    %33 = vector.broadcast %32 : i32 to vector<8x1xi32>
    %34 = arith.addi %31, %33 : vector<8x1xi32>
    %c2_i32 = arith.constant 2 : i32
    %35 = vector.broadcast %c2_i32 : i32 to vector<8x1xi32>
    %36 = arith.cmpi slt, %34, %35 : vector<8x1xi32>
    %37 = arith.extui %36 : vector<8x1xi1> to vector<8x1xi32>
    %38 = arith.sitofp %37 : vector<8x1xi32> to vector<8x1xf32>
    %39 = arith.subf %30, %0 : vector<8x1024xf32>
    %40 = vector.broadcast %38 : vector<8x1xf32> to vector<8x1024xf32>
    %41 = arith.mulf %39, %40 : vector<8x1024xf32>
    %42 = arith.mulf %41, %41 : vector<8x1024xf32>
    %43 = vector.shape_cast %42 : vector<8x1024xf32> to vector<1x8x1024xf32>
    %cst_23 = arith.constant dense<0.000000e+00> : vector<1xf32>
    %44 = vector.multi_reduction <add>, %43, %cst_23 [1, 2] : vector<1x8x1024xf32> to vector<1xf32>
    %45 = vector.shape_cast %44 : vector<1xf32> to vector<1x1x1xf32>
    %46 = vector.extract %45[0, 0, 0] : f32 from vector<1x1x1xf32>
    %cst_24 = arith.constant 5.000000e-01 : f32
    %47 = vector.broadcast %cst_24 : f32 to vector<8x1024xf32>
    %48 = arith.mulf %47, %30 : vector<8x1024xf32>
    %49 = math.tanh %48 : vector<8x1024xf32>
    %cst_25 = arith.constant 5.000000e-01 : f32
    %50 = vector.broadcast %cst_25 : f32 to vector<8x1024xf32>
    %51 = arith.mulf %50, %49 : vector<8x1024xf32>
    %cst_26 = arith.constant 5.000000e-01 : f32
    %52 = vector.broadcast %cst_26 : f32 to vector<8x1024xf32>
    %53 = arith.addf %51, %52 : vector<8x1024xf32>
    %c0_27 = arith.constant 0 : index
    %c0_28 = arith.constant 0 : index
    %54 = vector.load %arg11[%c0_27, %c0_28] : memref<8x1024xf32, #tpu.memory_space<vmem>>, vector<8x1024xf32>
    tpu.vector_store %arg11[%c0_27, %c0_28], %53 {strides = array<i32>} : memref<8x1024xf32, #tpu.memory_space<vmem>>, vector<8x1024xf32>,
    %55 = arith.subf %53, %0 : vector<8x1024xf32>
    %56 = vector.broadcast %38 : vector<8x1xf32> to vector<8x1024xf32>
    %57 = arith.mulf %55, %56 : vector<8x1024xf32>
    %58 = arith.mulf %57, %57 : vector<8x1024xf32>
    %59 = vector.shape_cast %58 : vector<8x1024xf32> to vector<1x8x1024xf32>
    %cst_29 = arith.constant dense<0.000000e+00> : vector<1xf32>
    %60 = vector.multi_reduction <add>, %59, %cst_29 [1, 2] : vector<1x8x1024xf32> to vector<1xf32>
    %61 = vector.shape_cast %60 : vector<1xf32> to vector<1x1x1xf32>
    %62 = vector.extract %61[0, 0, 0] : f32 from vector<1x1x1xf32>
    %63 = tpu.iota {dimensions = array<i32: 1>} : vector<1x8x128xi32>
    %64 = tpu.iota {dimensions = array<i32: 2>} : vector<1x8x128xi32>
    %c0_i32 = arith.constant 0 : i32
    %65 = vector.broadcast %c0_i32 : i32 to vector<1x8x128xi32>
    %66 = arith.cmpi eq, %63, %65 : vector<1x8x128xi32>
    %c0_i32_30 = arith.constant 0 : i32
    %67 = vector.broadcast %c0_i32_30 : i32 to vector<1x8x128xi32>
    %68 = arith.cmpi eq, %64, %67 : vector<1x8x128xi32>
    %69 = arith.andi %66, %68 : vector<1x8x128xi1>
    %c0_i32_31 = arith.constant 0 : i32
    %70 = vector.broadcast %c0_i32_31 : i32 to vector<1x8x128xi32>
    %71 = arith.cmpi eq, %63, %70 : vector<1x8x128xi32>
    %c1_i32 = arith.constant 1 : i32
    %72 = vector.broadcast %c1_i32 : i32 to vector<1x8x128xi32>
    %73 = arith.cmpi eq, %64, %72 : vector<1x8x128xi32>
    %74 = arith.andi %71, %73 : vector<1x8x128xi1>
    %cst_32 = arith.constant 0.000000e+00 : f32
    %75 = vector.broadcast %62 : f32 to vector<1x8x128xf32>
    %76 = vector.broadcast %cst_32 : f32 to vector<1x8x128xf32>
    %77 = arith.select %74, %75, %76 : vector<1x8x128xi1>, vector<1x8x128xf32>
    %78 = vector.broadcast %46 : f32 to vector<1x8x128xf32>
    %79 = arith.select %69, %78, %77 : vector<1x8x128xi1>, vector<1x8x128xf32>
    %c0_33 = arith.constant 0 : index
    %c0_34 = arith.constant 0 : index
    %c0_35 = arith.constant 0 : index
    %80 = vector.load %arg12[%c0_33, %c0_34, %c0_35] : memref<1x8x128xf32, #tpu.memory_space<vmem>>, vector<1x8x128xf32>
    tpu.vector_store %arg12[%c0_33, %c0_34, %c0_35], %79 {strides = array<i32>} : memref<1x8x128xf32, #tpu.memory_space<vmem>>, vector<1x8x128xf32>,
    return
  }
  func.func @transform_0(%arg0: i32) -> (i32, i32) {
    %c0_i32 = arith.constant 0 : i32
    %c0_i32_0 = arith.constant 0 : i32
    return %arg0, %c0_i32 : i32, i32
  }
  func.func @transform_1(%arg0: i32) -> (i32, i32) {
    %c0_i32 = arith.constant 0 : i32
    %c0_i32_0 = arith.constant 0 : i32
    return %arg0, %c0_i32 : i32, i32
  }
  func.func @transform_2(%arg0: i32) -> (i32, i32) {
    %c0_i32 = arith.constant 0 : i32
    %c0_i32_0 = arith.constant 0 : i32
    %c0_i32_1 = arith.constant 0 : i32
    return %c0_i32, %c0_i32_0 : i32, i32
  }
  func.func @transform_3(%arg0: i32) -> (i32, i32) {
    %c0_i32 = arith.constant 0 : i32
    %c0_i32_0 = arith.constant 0 : i32
    %c0_i32_1 = arith.constant 0 : i32
    return %c0_i32, %c0_i32_0 : i32, i32
  }
  func.func @transform_4(%arg0: i32) -> (i32, i32) {
    %c0_i32 = arith.constant 0 : i32
    %c0_i32_0 = arith.constant 0 : i32
    %c0_i32_1 = arith.constant 0 : i32
    return %c0_i32, %c0_i32_0 : i32, i32
  }
  func.func @transform_5(%arg0: i32) -> (i32, i32) {
    %c0_i32 = arith.constant 0 : i32
    %c0_i32_0 = arith.constant 0 : i32
    %c0_i32_1 = arith.constant 0 : i32
    return %c0_i32, %c0_i32_0 : i32, i32
  }
  func.func @transform_6(%arg0: i32) -> (i32, i32) {
    %c0_i32 = arith.constant 0 : i32
    %c0_i32_0 = arith.constant 0 : i32
    %c0_i32_1 = arith.constant 0 : i32
    return %c0_i32, %c0_i32_0 : i32, i32
  }
  func.func @transform_7(%arg0: i32) -> (i32, i32) {
    %c0_i32 = arith.constant 0 : i32
    %c0_i32_0 = arith.constant 0 : i32
    %c0_i32_1 = arith.constant 0 : i32
    return %c0_i32, %c0_i32_0 : i32, i32
  }
  func.func @transform_8(%arg0: i32) -> (i32, i32) {
    %c0_i32 = arith.constant 0 : i32
    %c0_i32_0 = arith.constant 0 : i32
    %c0_i32_1 = arith.constant 0 : i32
    return %c0_i32, %c0_i32_0 : i32, i32
  }
  func.func @transform_9(%arg0: i32) -> (i32, i32) {
    %c0_i32 = arith.constant 0 : i32
    %c0_i32_0 = arith.constant 0 : i32
    %c0_i32_1 = arith.constant 0 : i32
    return %c0_i32, %c0_i32_0 : i32, i32
  }
  func.func @transform_10(%arg0: i32) -> (i32, i32) {
    %c0_i32 = arith.constant 0 : i32
    %c0_i32_0 = arith.constant 0 : i32
    return %arg0, %c0_i32 : i32, i32
  }
  func.func @transform_11(%arg0: i32) -> (i32, i32, i32) {
    %c0_i32 = arith.constant 0 : i32
    %c0_i32_0 = arith.constant 0 : i32
    %c0_i32_1 = arith.constant 0 : i32
    return %arg0, %c0_i32, %c0_i32_0 : i32, i32, i32
  }
}

</mosaic_0001>

<llo_original>
// kernel: tpu_custom_call.1
$region0: #{tpu_custom_call.1}
  #allocation0 [shape = 'u32[]', space=smem, size = 0x4, offset = 0x4, fixed_abs, tag = 'smem constant byte address 0x4 - core index']
  #allocation1 [shape = 'u32[144,128]{1,0:T(1,128)}', space=vmem, size = 0x12000, scoped, tag = 'internal scratch']
  %s0 = inlined_call_operand.hbm [shape: f32[8,1024], index: 0, kind: input, shape index: {}]
  %s1 = inlined_call_operand.hbm [shape: f32[8,128], index: 1, kind: input, shape index: {}]
  %s2 = inlined_call_operand.hbm [shape: bf16[1024,128], index: 2, kind: input, shape index: {}]
  %s3 = inlined_call_operand.vmem [shape: f32[1,128], index: 3, kind: input, shape index: {}]
  %s4 = inlined_call_operand.hbm [shape: bf16[128,128], index: 4, kind: input, shape index: {}]
  %s5 = inlined_call_operand.vmem [shape: f32[1,128], index: 5, kind: input, shape index: {}]
  %s6 = inlined_call_operand.hbm [shape: bf16[128,128], index: 6, kind: input, shape index: {}]
  %s7 = inlined_call_operand.vmem [shape: f32[1,128], index: 7, kind: input, shape index: {}]
  %s8 = inlined_call_operand.hbm [shape: bf16[128,1024], index: 8, kind: input, shape index: {}]
  %s9 = inlined_call_operand.vmem [shape: f32[1,1024], index: 9, kind: input, shape index: {}]
  %s10 = inlined_call_operand.hbm [shape: f32[8,1024], index: 10, kind: output, shape index: {0}]
  %s11 = inlined_call_operand.hbm [shape: f32[1,8,128], index: 11, kind: output, shape index: {1}]
  %12 = xla_tuple %s10, %s11
  %s13 = sld [smem:[#allocation0]]
  $region82: #{tpu_custom_call.1} parent=0
    _
  %s15 = ssub.s32 1, %s13
  %s16 = scalar_select 0, %s15, %s13
  $region1: #{tpu_custom_call.1} parent=0
    #allocation2 [shape = 'u8[32768]{0}', space=vmem, size = 0x8000, scoped, tag = 'input window, operand 0, single buffered']
    #allocation3 [shape = 's32[1]{0}', space=sflag, size = 0x4, scoped, tag = 'scoped memory for tpu_custom_call.1']
    #allocation4 [shape = 's32[1]{0}', space=sflag, size = 0x4, scoped, tag = 'scoped memory for tpu_custom_call.1']
    #allocation5 [shape = 'u8[4096]{0}', space=vmem, size = 0x1000, scoped, tag = 'input window, operand 1, single buffered']
    #allocation6 [shape = 's32[1]{0}', space=sflag, size = 0x4, scoped, tag = 'scoped memory for tpu_custom_call.1']
    #allocation7 [shape = 'u8[262144]{0}', space=vmem, size = 0x40000, scoped, tag = 'input window, operand 2, single buffered']
    #allocation8 [shape = 'u8[32768]{0}', space=vmem, size = 0x8000, scoped, tag = 'input window, operand 4, single buffered']
    #allocation9 [shape = 's32[1]{0}', space=sflag, size = 0x4, scoped, tag = 'scoped memory for tpu_custom_call.1']
    #allocation10 [shape = 'u8[32768]{0}', space=vmem, size = 0x8000, scoped, tag = 'input window, operand 6, single buffered']
    #allocation11 [shape = 'u8[262144]{0}', space=vmem, size = 0x40000, scoped, tag = 'input window, operand 8, single buffered']
    #allocation12 [shape = 's32[1]{0}', space=sflag, size = 0x4, scoped, tag = 'scoped memory for tpu_custom_call.1']
    #allocation13 [shape = 'u8[32768]{0}', space=vmem, size = 0x8000, scoped, tag = 'output window, operand 0, single buffered']
    #allocation14 [shape = 'u8[4096]{0}', space=vmem, size = 0x1000, scoped, tag = 'output window, operand 1, single buffered']
    #allocation15 [shape = 's32[1]{0}', space=sflag, size = 0x4, scoped, tag = 'scoped memory for tpu_custom_call.1']
    %17 = vsyncpa [#allocation3], 0
    %18 = vsyncpa [#allocation6], 0
    %19 = vsyncpa [#allocation9], 0
    %20 = vsyncpa [#allocation12], 0
    %21 = vsyncpa [#allocation4], 0
    %22 = vsyncpa [#allocation15], 0
    // Predicated region
    $region2: #{tpu_custom_call.1} parent=1 // pred_check
      _
    $region3: #{tpu_custom_call.1} parent=1 // pred_check_branch
      %24 = sbr.rel (0) target = $region5
    $region4: #{tpu_custom_call.1} parent=1 // pred_region
      %s26 = ssub.s32 1024, 1024
      %27 = vsyncadd [#allocation3], %s26
      %s29 = sshll.u32 [#allocation2], 4
      %s30 = int_to_ptr.vmem [resolvable:$true] %s29
      %32 = dma.hbm_to_vmem [thread:$0]  %s0, 1024, %s30, [#allocation3]
    $region5: #{tpu_custom_call.1} parent=1 // pred_fallthru
      _
    // Predicated region
    $region6: #{tpu_custom_call.1} parent=1 // pred_check
      _
    $region7: #{tpu_custom_call.1} parent=1 // pred_check_branch
      %34 = sbr.rel (0) target = $region9
    $region8: #{tpu_custom_call.1} parent=1 // pred_region
      %s36 = ssub.s32 128, 128
      %37 = vsyncadd [#allocation6], %s36
      %s39 = sshll.u32 [#allocation5], 4
      %s40 = int_to_ptr.vmem [resolvable:$true] %s39
      %42 = dma.hbm_to_vmem [thread:$0]  %s1, 128, %s40, [#allocation6]
    $region9: #{tpu_custom_call.1} parent=1 // pred_fallthru
      _
    // Predicated region
    $region10: #{tpu_custom_call.1} parent=1 // pred_check
      _
    $region11: #{tpu_custom_call.1} parent=1 // pred_check_branch
      %44 = sbr.rel (0) target = $region13
    $region12: #{tpu_custom_call.1} parent=1 // pred_region
      %s46 = ssub.s32 8192, 8192
      %47 = vsyncadd [#allocation6], %s46
      %s48 = sshll.u32 [#allocation7], 4
      %s49 = int_to_ptr.vmem [resolvable:$true] %s48
      %54 = dma.hbm_to_vmem [thread:$0]  %s2, 8192, %s49, [#allocation6], 64, 64, 4
    $region13: #{tpu_custom_call.1} parent=1 // pred_fallthru
      _
    // Predicated region
    $region14: #{tpu_custom_call.1} parent=1 // pred_check
      _
    $region15: #{tpu_custom_call.1} parent=1 // pred_check_branch
      %56 = sbr.rel (0) target = $region17
    $region16: #{tpu_custom_call.1} parent=1 // pred_region
      _
    $region17: #{tpu_custom_call.1} parent=1 // pred_fallthru
      _
    // Predicated region
    $region18: #{tpu_custom_call.1} parent=1 // pred_check
      _
    $region19: #{tpu_custom_call.1} parent=1 // pred_check_branch
      %58 = sbr.rel (0) target = $region21
    $region20: #{tpu_custom_call.1} parent=1 // pred_region
      %s60 = ssub.s32 1024, 1024
      %61 = vsyncadd [#allocation9], %s60
      %s62 = sshll.u32 [#allocation8], 4
      %s63 = int_to_ptr.vmem [resolvable:$true] %s62
      %68 = dma.hbm_to_vmem [thread:$0]  %s4, 1024, %s63, [#allocation9], 64, 64, 4
    $region21: #{tpu_custom_call.1} parent=1 // pred_fallthru
      _
    // Predicated region
    $region22: #{tpu_custom_call.1} parent=1 // pred_check
      _
    $region23: #{tpu_custom_call.1} parent=1 // pred_check_branch
      %70 = sbr.rel (0) target = $region25
    $region24: #{tpu_custom_call.1} parent=1 // pred_region
      _
    $region25: #{tpu_custom_call.1} parent=1 // pred_fallthru
      _
    // Predicated region
    $region26: #{tpu_custom_call.1} parent=1 // pred_check
      _
    $region27: #{tpu_custom_call.1} parent=1 // pred_check_branch
      %72 = sbr.rel (0) target = $region29
    $region28: #{tpu_custom_call.1} parent=1 // pred_region
      %s74 = ssub.s32 1024, 1024
      %75 = vsyncadd [#allocation9], %s74
      %s76 = sshll.u32 [#allocation10], 4
      %s77 = int_to_ptr.vmem [resolvable:$true] %s76
      %82 = dma.hbm_to_vmem [thread:$0]  %s6, 1024, %s77, [#allocation9], 64, 64, 4
    $region29: #{tpu_custom_call.1} parent=1 // pred_fallthru
      _
    // Predicated region
    $region30: #{tpu_custom_call.1} parent=1 // pred_check
      _
    $region31: #{tpu_custom_call.1} parent=1 // pred_check_branch
      %84 = sbr.rel (0) target = $region33
    $region32: #{tpu_custom_call.1} parent=1 // pred_region
      _
    $region33: #{tpu_custom_call.1} parent=1 // pred_fallthru
      _
    // Predicated region
    $region34: #{tpu_custom_call.1} parent=1 // pred_check
      _
    $region35: #{tpu_custom_call.1} parent=1 // pred_check_branch
      %86 = sbr.rel (0) target = $region37
    $region36: #{tpu_custom_call.1} parent=1 // pred_region
      %s88 = ssub.s32 8192, 8192
      %89 = vsyncadd [#allocation12], %s88
      %s90 = sshll.u32 [#allocation11], 4
      %s91 = int_to_ptr.vmem [resolvable:$true] %s90
      %96 = dma.hbm_to_vmem [thread:$0]  %s8, 8192, %s91, [#allocation12], 512, 512, 32
    $region37: #{tpu_custom_call.1} parent=1 // pred_fallthru
      _
    // Predicated region
    $region38: #{tpu_custom_call.1} parent=1 // pred_check
      _
    $region39: #{tpu_custom_call.1} parent=1 // pred_check_branch
      %98 = sbr.rel (0) target = $region41
    $region40: #{tpu_custom_call.1} parent=1 // pred_region
      _
    $region41: #{tpu_custom_call.1} parent=1 // pred_fallthru
      _
    // Predicated region
    $region42: #{tpu_custom_call.1} parent=1 // pred_check
      _
    $region43: #{tpu_custom_call.1} parent=1 // pred_check_branch
      %100 = sbr.rel (0) target = $region45
    $region44: #{tpu_custom_call.1} parent=1 // pred_region
      %101 = dma.done [#allocation3], 1024
    $region45: #{tpu_custom_call.1} parent=1 // pred_fallthru
      _
    // Predicated region
    $region46: #{tpu_custom_call.1} parent=1 // pred_check
      _
    $region47: #{tpu_custom_call.1} parent=1 // pred_check_branch
      %103 = sbr.rel (0) target = $region49
    $region48: #{tpu_custom_call.1} parent=1 // pred_region
      %104 = dma.done [#allocation6], 128
    $region49: #{tpu_custom_call.1} parent=1 // pred_fallthru
      _
    // Predicated region
    $region50: #{tpu_custom_call.1} parent=1 // pred_check
      _
    $region51: #{tpu_custom_call.1} parent=1 // pred_check_branch
      %106 = sbr.rel (0) target = $region53
    $region52: #{tpu_custom_call.1} parent=1 // pred_region
      %107 = dma.done [#allocation6], 8192
    $region53: #{tpu_custom_call.1} parent=1 // pred_fallthru
      _
    // Predicated region
    $region54: #{tpu_custom_call.1} parent=1 // pred_check
      _
    $region55: #{tpu_custom_call.1} parent=1 // pred_check_branch
      %109 = sbr.rel (0) target = $region57
    $region56: #{tpu_custom_call.1} parent=1 // pred_region
      %110 = dma.done [#allocation9], 1024
    $region57: #{tpu_custom_call.1} parent=1 // pred_fallthru
      _
    // Predicated region
    $region58: #{tpu_custom_call.1} parent=1 // pred_check
      _
    $region59: #{tpu_custom_call.1} parent=1 // pred_check_branch
      %112 = sbr.rel (0) target = $region61
    $region60: #{tpu_custom_call.1} parent=1 // pred_region
      %113 = dma.done [#allocation9], 1024
    $region61: #{tpu_custom_call.1} parent=1 // pred_fallthru
      _
    // Predicated region
    $region62: #{tpu_custom_call.1} parent=1 // pred_check
      _
    $region63: #{tpu_custom_call.1} parent=1 // pred_check_branch
      %115 = sbr.rel (0) target = $region65
    $region64: #{tpu_custom_call.1} parent=1 // pred_region
      %116 = dma.done [#allocation12], 8192
    $region65: #{tpu_custom_call.1} parent=1 // pred_fallthru
      _
    %v118 = vld [vmem:[#allocation2] sm:$0xff]
    %v119 = vld [vmem:[#allocation2 + $0x8] sm:$0xff]
    %v120 = vld [vmem:[#allocation2 + $0x10] sm:$0xff]
    %v121 = vld [vmem:[#allocation2 + $0x18] sm:$0xff]
    %v122 = vld [vmem:[#allocation2 + $0x20] sm:$0xff]
    %v123 = vld [vmem:[#allocation2 + $0x28] sm:$0xff]
    %v124 = vld [vmem:[#allocation2 + $0x30] sm:$0xff]
    %v125 = vld [vmem:[#allocation2 + $0x38] sm:$0xff]
    %v126 = vld [vmem:[#allocation5] sm:$0xff]
    %v127 = vpack.c.bf16 %v118, %v118
    %v128 = vpack.c.bf16 %v119, %v119
    %v129 = vpack.c.bf16 %v120, %v120
    %v130 = vpack.c.bf16 %v121, %v121
    %v131 = vpack.c.bf16 %v122, %v122
    %v132 = vpack.c.bf16 %v123, %v123
    %v133 = vpack.c.bf16 %v124, %v124
    %v134 = vpack.c.bf16 %v125, %v125
    %v135 = vld [vmem:[#allocation7] sm:$0xf]
    %v136 = vld [vmem:[#allocation7 + $0x4] sm:$0xf]
    %v137 = vld [vmem:[#allocation7 + $0x8] sm:$0xf]
    %v138 = vld [vmem:[#allocation7 + $0xc] sm:$0xf]
    %v139 = vld [vmem:[#allocation7 + $0x10] sm:$0xf]
    %v140 = vld [vmem:[#allocation7 + $0x14] sm:$0xf]
    %v141 = vld [vmem:[#allocation7 + $0x18] sm:$0xf]
    %v142 = vld [vmem:[#allocation7 + $0x1c] sm:$0xf]
    %v143 = vld [vmem:[#allocation7 + $0x20] sm:$0xf]
    %v144 = vld [vmem:[#allocation7 + $0x24] sm:$0xf]
    %v145 = vld [vmem:[#allocation7 + $0x28] sm:$0xf]
    %v146 = vld [vmem:[#allocation7 + $0x2c] sm:$0xf]
    %v147 = vld [vmem:[#allocation7 + $0x30] sm:$0xf]
    %v148 = vld [vmem:[#allocation7 + $0x34] sm:$0xf]
    %v149 = vld [vmem:[#allocation7 + $0x38] sm:$0xf]
    %v150 = vld [vmem:[#allocation7 + $0x3c] sm:$0xf]
    %v151 = vld [vmem:[#allocation7 + $0x40] sm:$0xf]
    %v152 = vld [vmem:[#allocation7 + $0x44] sm:$0xf]
    %v153 = vld [vmem:[#allocation7 + $0x48] sm:$0xf]
    %v154 = vld [vmem:[#allocation7 + $0x4c] sm:$0xf]
    %v155 = vld [vmem:[#allocation7 + $0x50] sm:$0xf]
    %v156 = vld [vmem:[#allocation7 + $0x54] sm:$0xf]
    %v157 = vld [vmem:[#allocation7 + $0x58] sm:$0xf]
    %v158 = vld [vmem:[#allocation7 + $0x5c] sm:$0xf]
    %v159 = vld [vmem:[#allocation7 + $0x60] sm:$0xf]
    %v160 = vld [vmem:[#allocation7 + $0x64] sm:$0xf]
    %v161 = vld [vmem:[#allocation7 + $0x68] sm:$0xf]
    %v162 = vld [vmem:[#allocation7 + $0x6c] sm:$0xf]
    %v163 = vld [vmem:[#allocation7 + $0x70] sm:$0xf]
    %v164 = vld [vmem:[#allocation7 + $0x74] sm:$0xf]
    %v165 = vld [vmem:[#allocation7 + $0x78] sm:$0xf]
    %v166 = vld [vmem:[#allocation7 + $0x7c] sm:$0xf]
    %v167 = vld [vmem:[#allocation7 + $0x80] sm:$0xf]
    %v168 = vld [vmem:[#allocation7 + $0x84] sm:$0xf]
    %v169 = vld [vmem:[#allocation7 + $0x88] sm:$0xf]
    %v170 = vld [vmem:[#allocation7 + $0x8c] sm:$0xf]
    %v171 = vld [vmem:[#allocation7 + $0x90] sm:$0xf]
    %v172 = vld [vmem:[#allocation7 + $0x94] sm:$0xf]
    %v173 = vld [vmem:[#allocation7 + $0x98] sm:$0xf]
    %v174 = vld [vmem:[#allocation7 + $0x9c] sm:$0xf]
    %v175 = vld [vmem:[#allocation7 + $0xa0] sm:$0xf]
    %v176 = vld [vmem:[#allocation7 + $0xa4] sm:$0xf]
    %v177 = vld [vmem:[#allocation7 + $0xa8] sm:$0xf]
    %v178 = vld [vmem:[#allocation7 + $0xac] sm:$0xf]
    %v179 = vld [vmem:[#allocation7 + $0xb0] sm:$0xf]
    %v180 = vld [vmem:[#allocation7 + $0xb4] sm:$0xf]
    %v181 = vld [vmem:[#allocation7 + $0xb8] sm:$0xf]
    %v182 = vld [vmem:[#allocation7 + $0xbc] sm:$0xf]
    %v183 = vld [vmem:[#allocation7 + $0xc0] sm:$0xf]
    %v184 = vld [vmem:[#allocation7 + $0xc4] sm:$0xf]
    %v185 = vld [vmem:[#allocation7 + $0xc8] sm:$0xf]
    %v186 = vld [vmem:[#allocation7 + $0xcc] sm:$0xf]
    %v187 = vld [vmem:[#allocation7 + $0xd0] sm:$0xf]
    %v188 = vld [vmem:[#allocation7 + $0xd4] sm:$0xf]
    %v189 = vld [vmem:[#allocation7 + $0xd8] sm:$0xf]
    %v190 = vld [vmem:[#allocation7 + $0xdc] sm:$0xf]
    %v191 = vld [vmem:[#allocation7 + $0xe0] sm:$0xf]
    %v192 = vld [vmem:[#allocation7 + $0xe4] sm:$0xf]
    %v193 = vld [vmem:[#allocation7 + $0xe8] sm:$0xf]
    %v194 = vld [vmem:[#allocation7 + $0xec] sm:$0xf]
    %v195 = vld [vmem:[#allocation7 + $0xf0] sm:$0xf]
    %v196 = vld [vmem:[#allocation7 + $0xf4] sm:$0xf]
    %v197 = vld [vmem:[#allocation7 + $0xf8] sm:$0xf]
    %v198 = vld [vmem:[#allocation7 + $0xfc] sm:$0xf]
    %v199 = vld [vmem:[#allocation7 + $0x100] sm:$0xf]
    %v200 = vld [vmem:[#allocation7 + $0x104] sm:$0xf]
    %v201 = vld [vmem:[#allocation7 + $0x108] sm:$0xf]
    %v202 = vld [vmem:[#allocation7 + $0x10c] sm:$0xf]
    %v203 = vld [vmem:[#allocation7 + $0x110] sm:$0xf]
    %v204 = vld [vmem:[#allocation7 + $0x114] sm:$0xf]
    %v205 = vld [vmem:[#allocation7 + $0x118] sm:$0xf]
    %v206 = vld [vmem:[#allocation7 + $0x11c] sm:$0xf]
    %v207 = vld [vmem:[#allocation7 + $0x120] sm:$0xf]
    %v208 = vld [vmem:[#allocation7 + $0x124] sm:$0xf]
    %v209 = vld [vmem:[#allocation7 + $0x128] sm:$0xf]
    %v210 = vld [vmem:[#allocation7 + $0x12c] sm:$0xf]
    %v211 = vld [vmem:[#allocation7 + $0x130] sm:$0xf]
    %v212 = vld [vmem:[#allocation7 + $0x134] sm:$0xf]
    %v213 = vld [vmem:[#allocation7 + $0x138] sm:$0xf]
    %v214 = vld [vmem:[#allocation7 + $0x13c] sm:$0xf]
    %v215 = vld [vmem:[#allocation7 + $0x140] sm:$0xf]
    %v216 = vld [vmem:[#allocation7 + $0x144] sm:$0xf]
    %v217 = vld [vmem:[#allocation7 + $0x148] sm:$0xf]
    %v218 = vld [vmem:[#allocation7 + $0x14c] sm:$0xf]
    %v219 = vld [vmem:[#allocation7 + $0x150] sm:$0xf]
    %v220 = vld [vmem:[#allocation7 + $0x154] sm:$0xf]
    %v221 = vld [vmem:[#allocation7 + $0x158] sm:$0xf]
    %v222 = vld [vmem:[#allocation7 + $0x15c] sm:$0xf]
    %v223 = vld [vmem:[#allocation7 + $0x160] sm:$0xf]
    %v224 = vld [vmem:[#allocation7 + $0x164] sm:$0xf]
    %v225 = vld [vmem:[#allocation7 + $0x168] sm:$0xf]
    %v226 = vld [vmem:[#allocation7 + $0x16c] sm:$0xf]
    %v227 = vld [vmem:[#allocation7 + $0x170] sm:$0xf]
    %v228 = vld [vmem:[#allocation7 + $0x174] sm:$0xf]
    %v229 = vld [vmem:[#allocation7 + $0x178] sm:$0xf]
    %v230 = vld [vmem:[#allocation7 + $0x17c] sm:$0xf]
    %v231 = vld [vmem:[#allocation7 + $0x180] sm:$0xf]
    %v232 = vld [vmem:[#allocation7 + $0x184] sm:$0xf]
    %v233 = vld [vmem:[#allocation7 + $0x188] sm:$0xf]
    %v234 = vld [vmem:[#allocation7 + $0x18c] sm:$0xf]
    %v235 = vld [vmem:[#allocation7 + $0x190] sm:$0xf]
    %v236 = vld [vmem:[#allocation7 + $0x194] sm:$0xf]
    %v237 = vld [vmem:[#allocation7 + $0x198] sm:$0xf]
    %v238 = vld [vmem:[#allocation7 + $0x19c] sm:$0xf]
    %v239 = vld [vmem:[#allocation7 + $0x1a0] sm:$0xf]
    %v240 = vld [vmem:[#allocation7 + $0x1a4] sm:$0xf]
    %v241 = vld [vmem:[#allocation7 + $0x1a8] sm:$0xf]
    %v242 = vld [vmem:[#allocation7 + $0x1ac] sm:$0xf]
    %v243 = vld [vmem:[#allocation7 + $0x1b0] sm:$0xf]
    %v244 = vld [vmem:[#allocation7 + $0x1b4] sm:$0xf]
    %v245 = vld [vmem:[#allocation7 + $0x1b8] sm:$0xf]
    %v246 = vld [vmem:[#allocation7 + $0x1bc] sm:$0xf]
    %v247 = vld [vmem:[#allocation7 + $0x1c0] sm:$0xf]
    %v248 = vld [vmem:[#allocation7 + $0x1c4] sm:$0xf]
    %v249 = vld [vmem:[#allocation7 + $0x1c8] sm:$0xf]
    %v250 = vld [vmem:[#allocation7 + $0x1cc] sm:$0xf]
    %v251 = vld [vmem:[#allocation7 + $0x1d0] sm:$0xf]
    %v252 = vld [vmem:[#allocation7 + $0x1d4] sm:$0xf]
    %v253 = vld [vmem:[#allocation7 + $0x1d8] sm:$0xf]
    %v254 = vld [vmem:[#allocation7 + $0x1dc] sm:$0xf]
    %v255 = vld [vmem:[#allocation7 + $0x1e0] sm:$0xf]
    %v256 = vld [vmem:[#allocation7 + $0x1e4] sm:$0xf]
    %v257 = vld [vmem:[#allocation7 + $0x1e8] sm:$0xf]
    %v258 = vld [vmem:[#allocation7 + $0x1ec] sm:$0xf]
    %v259 = vld [vmem:[#allocation7 + $0x1f0] sm:$0xf]
    %v260 = vld [vmem:[#allocation7 + $0x1f4] sm:$0xf]
    %v261 = vld [vmem:[#allocation7 + $0x1f8] sm:$0xf]
    %v262 = vld [vmem:[#allocation7 + $0x1fc] sm:$0xf]
    %v263 = vld [vmem:[%s3] sm:$0x1]
    %v265 = vlaneseq
    %v266 = vshrl.u32 %v265, 7
    %v267 = vsub.s32 0, %v266
    %v268 = vrot.slane %v263, %v267
    %v398 = vunpack.c.l.b16 %v135
    %v399 = vunpack.c.l.b16 %v136
    %v400 = vunpack.c.l.b16 %v137
    %v401 = vunpack.c.l.b16 %v138
    %v402 = vunpack.c.l.b16 %v139
    %v403 = vunpack.c.l.b16 %v140
    %v404 = vunpack.c.l.b16 %v141
    %v405 = vunpack.c.l.b16 %v142
    %v406 = vunpack.c.l.b16 %v143
    %v407 = vunpack.c.l.b16 %v144
    %v408 = vunpack.c.l.b16 %v145
    %v409 = vunpack.c.l.b16 %v146
    %v410 = vunpack.c.l.b16 %v147
    %v411 = vunpack.c.l.b16 %v148
    %v412 = vunpack.c.l.b16 %v149
    %v413 = vunpack.c.l.b16 %v150
    %v414 = vunpack.c.l.b16 %v151
    %v415 = vunpack.c.l.b16 %v152
    %v416 = vunpack.c.l.b16 %v153
    %v417 = vunpack.c.l.b16 %v154
    %v418 = vunpack.c.l.b16 %v155
    %v419 = vunpack.c.l.b16 %v156
    %v420 = vunpack.c.l.b16 %v157
    %v421 = vunpack.c.l.b16 %v158
    %v422 = vunpack.c.l.b16 %v159
    %v423 = vunpack.c.l.b16 %v160
    %v424 = vunpack.c.l.b16 %v161
    %v425 = vunpack.c.l.b16 %v162
    %v426 = vunpack.c.l.b16 %v163
    %v427 = vunpack.c.l.b16 %v164
    %v428 = vunpack.c.l.b16 %v165
    %v429 = vunpack.c.l.b16 %v166
    %v430 = vunpack.c.l.b16 %v167
    %v431 = vunpack.c.l.b16 %v168
    %v432 = vunpack.c.l.b16 %v169
    %v433 = vunpack.c.l.b16 %v170
    %v434 = vunpack.c.l.b16 %v171
    %v435 = vunpack.c.l.b16 %v172
    %v436 = vunpack.c.l.b16 %v173
    %v437 = vunpack.c.l.b16 %v174
    %v438 = vunpack.c.l.b16 %v175
    %v439 = vunpack.c.l.b16 %v176
    %v440 = vunpack.c.l.b16 %v177
    %v441 = vunpack.c.l.b16 %v178
    %v442 = vunpack.c.l.b16 %v179
    %v443 = vunpack.c.l.b16 %v180
    %v444 = vunpack.c.l.b16 %v181
    %v445 = vunpack.c.l.b16 %v182
    %v446 = vunpack.c.l.b16 %v183
    %v447 = vunpack.c.l.b16 %v184
    %v448 = vunpack.c.l.b16 %v185
    %v449 = vunpack.c.l.b16 %v186
    %v450 = vunpack.c.l.b16 %v187
    %v451 = vunpack.c.l.b16 %v188
    %v452 = vunpack.c.l.b16 %v189
    %v453 = vunpack.c.l.b16 %v190
    %v454 = vunpack.c.l.b16 %v191
    %v455 = vunpack.c.l.b16 %v192
    %v456 = vunpack.c.l.b16 %v193
    %v457 = vunpack.c.l.b16 %v194
    %v458 = vunpack.c.l.b16 %v195
    %v459 = vunpack.c.l.b16 %v196
    %v460 = vunpack.c.l.b16 %v197
    %v461 = vunpack.c.l.b16 %v198
    %v462 = vunpack.c.l.b16 %v199
    %v463 = vunpack.c.l.b16 %v200
    %v464 = vunpack.c.l.b16 %v201
    %v465 = vunpack.c.l.b16 %v202
    %v466 = vunpack.c.l.b16 %v203
    %v467 = vunpack.c.l.b16 %v204
    %v468 = vunpack.c.l.b16 %v205
    %v469 = vunpack.c.l.b16 %v206
    %v470 = vunpack.c.l.b16 %v207
    %v471 = vunpack.c.l.b16 %v208
    %v472 = vunpack.c.l.b16 %v209
    %v473 = vunpack.c.l.b16 %v210
    %v474 = vunpack.c.l.b16 %v211
    %v475 = vunpack.c.l.b16 %v212
    %v476 = vunpack.c.l.b16 %v213
    %v477 = vunpack.c.l.b16 %v214
    %v478 = vunpack.c.l.b16 %v215
    %v479 = vunpack.c.l.b16 %v216
    %v480 = vunpack.c.l.b16 %v217
    %v481 = vunpack.c.l.b16 %v218
    %v482 = vunpack.c.l.b16 %v219
    %v483 = vunpack.c.l.b16 %v220
    %v484 = vunpack.c.l.b16 %v221
    %v485 = vunpack.c.l.b16 %v222
    %v486 = vunpack.c.l.b16 %v223
    %v487 = vunpack.c.l.b16 %v224
    %v488 = vunpack.c.l.b16 %v225
    %v489 = vunpack.c.l.b16 %v226
    %v490 = vunpack.c.l.b16 %v227
    %v491 = vunpack.c.l.b16 %v228
    %v492 = vunpack.c.l.b16 %v229
    %v493 = vunpack.c.l.b16 %v230
    %v494 = vunpack.c.l.b16 %v231
    %v495 = vunpack.c.l.b16 %v232
    %v496 = vunpack.c.l.b16 %v233
    %v497 = vunpack.c.l.b16 %v234
    %v498 = vunpack.c.l.b16 %v235
    %v499 = vunpack.c.l.b16 %v236
    %v500 = vunpack.c.l.b16 %v237
    %v501 = vunpack.c.l.b16 %v238
    %v502 = vunpack.c.l.b16 %v239
    %v503 = vunpack.c.l.b16 %v240
    %v504 = vunpack.c.l.b16 %v241
    %v505 = vunpack.c.l.b16 %v242
    %v506 = vunpack.c.l.b16 %v243
    %v507 = vunpack.c.l.b16 %v244
    %v508 = vunpack.c.l.b16 %v245
    %v509 = vunpack.c.l.b16 %v246
    %v510 = vunpack.c.l.b16 %v247
    %v511 = vunpack.c.l.b16 %v248
    %v512 = vunpack.c.l.b16 %v249
    %v513 = vunpack.c.l.b16 %v250
    %v514 = vunpack.c.l.b16 %v251
    %v515 = vunpack.c.l.b16 %v252
    %v516 = vunpack.c.l.b16 %v253
    %v517 = vunpack.c.l.b16 %v254
    %v518 = vunpack.c.l.b16 %v255
    %v519 = vunpack.c.l.b16 %v256
    %v520 = vunpack.c.l.b16 %v257
    %v521 = vunpack.c.l.b16 %v258
    %v522 = vunpack.c.l.b16 %v259
    %v523 = vunpack.c.l.b16 %v260
    %v524 = vunpack.c.l.b16 %v261
    %v525 = vunpack.c.l.b16 %v262
    %v526 = vpack.c.b16 %v399, %v398
    %v527 = vpack.c.b16 %v401, %v400
    %v528 = vpack.c.b16 %v403, %v402
    %v529 = vpack.c.b16 %v405, %v404
    %v530 = vpack.c.b16 %v407, %v406
    %v531 = vpack.c.b16 %v409, %v408
    %v532 = vpack.c.b16 %v411, %v410
    %v533 = vpack.c.b16 %v413, %v412
    %v534 = vpack.c.b16 %v415, %v414
    %v535 = vpack.c.b16 %v417, %v416
    %v536 = vpack.c.b16 %v419, %v418
    %v537 = vpack.c.b16 %v421, %v420
    %v538 = vpack.c.b16 %v423, %v422
    %v539 = vpack.c.b16 %v425, %v424
    %v540 = vpack.c.b16 %v427, %v426
    %v541 = vpack.c.b16 %v429, %v428
    %v542 = vpack.c.b16 %v431, %v430
    %v543 = vpack.c.b16 %v433, %v432
    %v544 = vpack.c.b16 %v435, %v434
    %v545 = vpack.c.b16 %v437, %v436
    %v546 = vpack.c.b16 %v439, %v438
    %v547 = vpack.c.b16 %v441, %v440
    %v548 = vpack.c.b16 %v443, %v442
    %v549 = vpack.c.b16 %v445, %v444
    %v550 = vpack.c.b16 %v447, %v446
    %v551 = vpack.c.b16 %v449, %v448
    %v552 = vpack.c.b16 %v451, %v450
    %v553 = vpack.c.b16 %v453, %v452
    %v554 = vpack.c.b16 %v455, %v454
    %v555 = vpack.c.b16 %v457, %v456
    %v556 = vpack.c.b16 %v459, %v458
    %v557 = vpack.c.b16 %v461, %v460
    %v558 = vpack.c.b16 %v463, %v462
    %v559 = vpack.c.b16 %v465, %v464
    %v560 = vpack.c.b16 %v467, %v466
    %v561 = vpack.c.b16 %v469, %v468
    %v562 = vpack.c.b16 %v471, %v470
    %v563 = vpack.c.b16 %v473, %v472
    %v564 = vpack.c.b16 %v475, %v474
    %v565 = vpack.c.b16 %v477, %v476
    %v566 = vpack.c.b16 %v479, %v478
    %v567 = vpack.c.b16 %v481, %v480
    %v568 = vpack.c.b16 %v483, %v482
    %v569 = vpack.c.b16 %v485, %v484
    %v570 = vpack.c.b16 %v487, %v486
    %v571 = vpack.c.b16 %v489, %v488
    %v572 = vpack.c.b16 %v491, %v490
    %v573 = vpack.c.b16 %v493, %v492
    %v574 = vpack.c.b16 %v495, %v494
    %v575 = vpack.c.b16 %v497, %v496
    %v576 = vpack.c.b16 %v499, %v498
    %v577 = vpack.c.b16 %v501, %v500
    %v578 = vpack.c.b16 %v503, %v502
    %v579 = vpack.c.b16 %v505, %v504
    %v580 = vpack.c.b16 %v507, %v506
    %v581 = vpack.c.b16 %v509, %v508
    %v582 = vpack.c.b16 %v511, %v510
    %v583 = vpack.c.b16 %v513, %v512
    %v584 = vpack.c.b16 %v515, %v514
    %v585 = vpack.c.b16 %v517, %v516
    %v586 = vpack.c.b16 %v519, %v518
    %v587 = vpack.c.b16 %v521, %v520
    %v588 = vpack.c.b16 %v523, %v522
    %v589 = vpack.c.b16 %v525, %v524
    %654 = vmatprep.subr.bf16.mxu0 0
    %655 = vmatpush1.bf16.msra.mxu0 %v526
    %656 = vmatprep.subr.bf16.mxu0 0
    %657 = vmatpush1.bf16.msra.mxu0 %v527
    %658 = vmatprep.subr.bf16.mxu0 0
    %659 = vmatpush1.bf16.msra.mxu0 %v528
    %660 = vmatprep.subr.bf16.mxu0 0
    %661 = vmatpush1.bf16.msra.mxu0 %v529
    %662 = vmatprep.subr.bf16.mxu0 0
    %663 = vmatpush1.bf16.msra.mxu0 %v530
    %664 = vmatprep.subr.bf16.mxu0 0
    %665 = vmatpush1.bf16.msra.mxu0 %v531
    %666 = vmatprep.subr.bf16.mxu0 0
    %667 = vmatpush1.bf16.msra.mxu0 %v532
    %668 = vmatprep.subr.bf16.mxu0 0
    %669 = vmatpush1.bf16.msra.mxu0 %v533
    %670 = vmatprep.subr.bf16.mxu0 0
    %671 = vmatpush1.bf16.msra.mxu0 %v534
    %672 = vmatprep.subr.bf16.mxu0 0
    %673 = vmatpush1.bf16.msra.mxu0 %v535
    %674 = vmatprep.subr.bf16.mxu0 0
    %675 = vmatpush1.bf16.msra.mxu0 %v536
    %676 = vmatprep.subr.bf16.mxu0 0
    %677 = vmatpush1.bf16.msra.mxu0 %v537
    %678 = vmatprep.subr.bf16.mxu0 0
    %679 = vmatpush1.bf16.msra.mxu0 %v538
    %680 = vmatprep.subr.bf16.mxu0 0
    %681 = vmatpush1.bf16.msra.mxu0 %v539
    %682 = vmatprep.subr.bf16.mxu0 0
    %683 = vmatpush1.bf16.msra.mxu0 %v540
    %684 = vmatprep.subr.bf16.mxu0 0
    %685 = vmatpush1.bf16.msra.mxu0 %v541
    %686 = vmatprep.mubr.bf16.mxu0 %v128
    %687 = vmatmul.mubr.bf16.gmra.mrb[0].mxu0 %v127
    %v688 = vpop.f32.mrb[0].mxu0
    %v689 = vadd.f32 %v268, %v688
    %v690 = vpop.f32.mrb[0].mxu0
    %v691 = vpop.f32.mrb[0].mxu0
    %v692 = vpop.f32.mrb[0].mxu0
    %693 = vdwg.mxu0
    %694 = vmatprep.subr.bf16.mxu0 0
    %695 = vmatpush1.bf16.msra.mxu0 %v542
    %696 = vmatprep.subr.bf16.mxu0 0
    %697 = vmatpush1.bf16.msra.mxu0 %v543
    %698 = vmatprep.subr.bf16.mxu0 0
    %699 = vmatpush1.bf16.msra.mxu0 %v544
    %700 = vmatprep.subr.bf16.mxu0 0
    %701 = vmatpush1.bf16.msra.mxu0 %v545
    %702 = vmatprep.subr.bf16.mxu0 0
    %703 = vmatpush1.bf16.msra.mxu0 %v546
    %704 = vmatprep.subr.bf16.mxu0 0
    %705 = vmatpush1.bf16.msra.mxu0 %v547
    %706 = vmatprep.subr.bf16.mxu0 0
    %707 = vmatpush1.bf16.msra.mxu0 %v548
    %708 = vmatprep.subr.bf16.mxu0 0
    %709 = vmatpush1.bf16.msra.mxu0 %v549
    %710 = vmatprep.subr.bf16.mxu0 0
    %711 = vmatpush1.bf16.msra.mxu0 %v550
    %712 = vmatprep.subr.bf16.mxu0 0
    %713 = vmatpush1.bf16.msra.mxu0 %v551
    %714 = vmatprep.subr.bf16.mxu0 0
    %715 = vmatpush1.bf16.msra.mxu0 %v552
    %716 = vmatprep.subr.bf16.mxu0 0
    %717 = vmatpush1.bf16.msra.mxu0 %v553
    %718 = vmatprep.subr.bf16.mxu0 0
    %719 = vmatpush1.bf16.msra.mxu0 %v554
    %720 = vmatprep.subr.bf16.mxu0 0
    %721 = vmatpush1.bf16.msra.mxu0 %v555
    %722 = vmatprep.subr.bf16.mxu0 0
    %723 = vmatpush1.bf16.msra.mxu0 %v556
    %724 = vmatprep.subr.bf16.mxu0 0
    %725 = vmatpush1.bf16.msra.mxu0 %v557
    %726 = vmatprep.mubr.bf16.mxu0 %v130
    %727 = vmatmul.mubr.bf16.gmra.mrb[0].mxu0 %v129
    %v728 = vpop.f32.mrb[0].mxu0
    %v729 = vadd.f32 %v689, %v728
    %v730 = vpop.f32.mrb[0].mxu0
    %v731 = vpop.f32.mrb[0].mxu0
    %v732 = vpop.f32.mrb[0].mxu0
    %733 = vdwg.mxu0
    %734 = vmatprep.subr.bf16.mxu0 0
    %735 = vmatpush1.bf16.msra.mxu0 %v558
    %736 = vmatprep.subr.bf16.mxu0 0
    %737 = vmatpush1.bf16.msra.mxu0 %v559
    %738 = vmatprep.subr.bf16.mxu0 0
    %739 = vmatpush1.bf16.msra.mxu0 %v560
    %740 = vmatprep.subr.bf16.mxu0 0
    %741 = vmatpush1.bf16.msra.mxu0 %v561
    %742 = vmatprep.subr.bf16.mxu0 0
    %743 = vmatpush1.bf16.msra.mxu0 %v562
    %744 = vmatprep.subr.bf16.mxu0 0
    %745 = vmatpush1.bf16.msra.mxu0 %v563
    %746 = vmatprep.subr.bf16.mxu0 0
    %747 = vmatpush1.bf16.msra.mxu0 %v564
    %748 = vmatprep.subr.bf16.mxu0 0
    %749 = vmatpush1.bf16.msra.mxu0 %v565
    %750 = vmatprep.subr.bf16.mxu0 0
    %751 = vmatpush1.bf16.msra.mxu0 %v566
    %752 = vmatprep.subr.bf16.mxu0 0
    %753 = vmatpush1.bf16.msra.mxu0 %v567
    %754 = vmatprep.subr.bf16.mxu0 0
    %755 = vmatpush1.bf16.msra.mxu0 %v568
    %756 = vmatprep.subr.bf16.mxu0 0
    %757 = vmatpush1.bf16.msra.mxu0 %v569
    %758 = vmatprep.subr.bf16.mxu0 0
    %759 = vmatpush1.bf16.msra.mxu0 %v570
    %760 = vmatprep.subr.bf16.mxu0 0
    %761 = vmatpush1.bf16.msra.mxu0 %v571
    %762 = vmatprep.subr.bf16.mxu0 0
    %763 = vmatpush1.bf16.msra.mxu0 %v572
    %764 = vmatprep.subr.bf16.mxu0 0
    %765 = vmatpush1.bf16.msra.mxu0 %v573
    %766 = vmatprep.mubr.bf16.mxu0 %v132
    %767 = vmatmul.mubr.bf16.gmra.mrb[0].mxu0 %v131
    %v768 = vpop.f32.mrb[0].mxu0
    %v769 = vadd.f32 %v729, %v768
    %v770 = vpop.f32.mrb[0].mxu0
    %v771 = vpop.f32.mrb[0].mxu0
    %v772 = vpop.f32.mrb[0].mxu0
    %773 = vdwg.mxu0
    %774 = vmatprep.subr.bf16.mxu0 0
    %775 = vmatpush1.bf16.msra.mxu0 %v574
    %776 = vmatprep.subr.bf16.mxu0 0
    %777 = vmatpush1.bf16.msra.mxu0 %v575
    %778 = vmatprep.subr.bf16.mxu0 0
    %779 = vmatpush1.bf16.msra.mxu0 %v576
    %780 = vmatprep.subr.bf16.mxu0 0
    %781 = vmatpush1.bf16.msra.mxu0 %v577
    %782 = vmatprep.subr.bf16.mxu0 0
    %783 = vmatpush1.bf16.msra.mxu0 %v578
    %784 = vmatprep.subr.bf16.mxu0 0
    %785 = vmatpush1.bf16.msra.mxu0 %v579
    %786 = vmatprep.subr.bf16.mxu0 0
    %787 = vmatpush1.bf16.msra.mxu0 %v580
    %788 = vmatprep.subr.bf16.mxu0 0
    %789 = vmatpush1.bf16.msra.mxu0 %v581
    %790 = vmatprep.subr.bf16.mxu0 0
    %791 = vmatpush1.bf16.msra.mxu0 %v582
    %792 = vmatprep.subr.bf16.mxu0 0
    %793 = vmatpush1.bf16.msra.mxu0 %v583
    %794 = vmatprep.subr.bf16.mxu0 0
    %795 = vmatpush1.bf16.msra.mxu0 %v584
    %796 = vmatprep.subr.bf16.mxu0 0
    %797 = vmatpush1.bf16.msra.mxu0 %v585
    %798 = vmatprep.subr.bf16.mxu0 0
    %799 = vmatpush1.bf16.msra.mxu0 %v586
    %800 = vmatprep.subr.bf16.mxu0 0
    %801 = vmatpush1.bf16.msra.mxu0 %v587
    %802 = vmatprep.subr.bf16.mxu0 0
    %803 = vmatpush1.bf16.msra.mxu0 %v588
    %804 = vmatprep.subr.bf16.mxu0 0
    %805 = vmatpush1.bf16.msra.mxu0 %v589
    %806 = vmatprep.mubr.bf16.mxu0 %v134
    %807 = vmatmul.mubr.bf16.gmra.mrb[0].mxu0 %v133
    %v808 = vpop.f32.mrb[0].mxu0
    %v809 = vadd.f32 %v769, %v808
    %v810 = vpop.f32.mrb[0].mxu0
    %v811 = vpop.f32.mrb[0].mxu0
    %v812 = vpop.f32.mrb[0].mxu0
    %813 = vdwg.mxu0
    %v814 = vtanh.pop %v809
    %v815 = vpack.c.bf16 %v814, %v814
    %v816 = vld [vmem:[#allocation8] sm:$0xf]
    %v817 = vld [vmem:[#allocation8 + $0x4] sm:$0xf]
    %v818 = vld [vmem:[#allocation8 + $0x8] sm:$0xf]
    %v819 = vld [vmem:[#allocation8 + $0xc] sm:$0xf]
    %v820 = vld [vmem:[#allocation8 + $0x10] sm:$0xf]
    %v821 = vld [vmem:[#allocation8 + $0x14] sm:$0xf]
    %v822 = vld [vmem:[#allocation8 + $0x18] sm:$0xf]
    %v823 = vld [vmem:[#allocation8 + $0x1c] sm:$0xf]
    %v824 = vld [vmem:[#allocation8 + $0x20] sm:$0xf]
    %v825 = vld [vmem:[#allocation8 + $0x24] sm:$0xf]
    %v826 = vld [vmem:[#allocation8 + $0x28] sm:$0xf]
    %v827 = vld [vmem:[#allocation8 + $0x2c] sm:$0xf]
    %v828 = vld [vmem:[#allocation8 + $0x30] sm:$0xf]
    %v829 = vld [vmem:[#allocation8 + $0x34] sm:$0xf]
    %v830 = vld [vmem:[#allocation8 + $0x38] sm:$0xf]
    %v831 = vld [vmem:[#allocation8 + $0x3c] sm:$0xf]
    %v832 = vld [vmem:[%s5] sm:$0x1]
    %v834 = vlaneseq
    %v835 = vshrl.u32 %v834, 7
    %v836 = vsub.s32 0, %v835
    %v837 = vrot.slane %v832, %v836
    %v855 = vunpack.c.l.b16 %v816
    %v856 = vunpack.c.l.b16 %v817
    %v857 = vunpack.c.l.b16 %v818
    %v858 = vunpack.c.l.b16 %v819
    %v859 = vunpack.c.l.b16 %v820
    %v860 = vunpack.c.l.b16 %v821
    %v861 = vunpack.c.l.b16 %v822
    %v862 = vunpack.c.l.b16 %v823
    %v863 = vunpack.c.l.b16 %v824
    %v864 = vunpack.c.l.b16 %v825
    %v865 = vunpack.c.l.b16 %v826
    %v866 = vunpack.c.l.b16 %v827
    %v867 = vunpack.c.l.b16 %v828
    %v868 = vunpack.c.l.b16 %v829
    %v869 = vunpack.c.l.b16 %v830
    %v870 = vunpack.c.l.b16 %v831
    %v871 = vpack.c.b16 %v856, %v855
    %v872 = vpack.c.b16 %v858, %v857
    %v873 = vpack.c.b16 %v860, %v859
    %v874 = vpack.c.b16 %v862, %v861
    %v875 = vpack.c.b16 %v864, %v863
    %v876 = vpack.c.b16 %v866, %v865
    %v877 = vpack.c.b16 %v868, %v867
    %v878 = vpack.c.b16 %v870, %v869
    %887 = vmatprep.subr.bf16.mxu0 0
    %888 = vmatpush1.bf16.msra.mxu0 %v871
    %889 = vmatprep.subr.bf16.mxu0 0
    %890 = vmatpush1.bf16.msra.mxu0 %v872
    %891 = vmatprep.subr.bf16.mxu0 0
    %892 = vmatpush1.bf16.msra.mxu0 %v873
    %893 = vmatprep.subr.bf16.mxu0 0
    %894 = vmatpush1.bf16.msra.mxu0 %v874
    %895 = vmatprep.subr.bf16.mxu0 0
    %896 = vmatpush1.bf16.msra.mxu0 %v875
    %897 = vmatprep.subr.bf16.mxu0 0
    %898 = vmatpush1.bf16.msra.mxu0 %v876
    %899 = vmatprep.subr.bf16.mxu0 0
    %900 = vmatpush1.bf16.msra.mxu0 %v877
    %901 = vmatprep.subr.bf16.mxu0 0
    %902 = vmatpush1.bf16.msra.mxu0 %v878
    %903 = vmatprep.subr.bf16.mxu0 0
    %904 = vmatpush1.bf16.msra.mxu0 0
    %905 = vmatprep.subr.bf16.mxu0 0
    %906 = vmatpush1.bf16.msra.mxu0 0
    %907 = vmatprep.subr.bf16.mxu0 0
    %908 = vmatpush1.bf16.msra.mxu0 0
    %909 = vmatprep.subr.bf16.mxu0 0
    %910 = vmatpush1.bf16.msra.mxu0 0
    %911 = vmatprep.subr.bf16.mxu0 0
    %912 = vmatpush1.bf16.msra.mxu0 0
    %913 = vmatprep.subr.bf16.mxu0 0
    %914 = vmatpush1.bf16.msra.mxu0 0
    %915 = vmatprep.subr.bf16.mxu0 0
    %916 = vmatpush1.bf16.msra.mxu0 0
    %917 = vmatprep.subr.bf16.mxu0 0
    %918 = vmatpush1.bf16.msra.mxu0 0
    %919 = vmatprep.mubr.bf16.mxu0 0
    %920 = vmatmul.mubr.bf16.gmra.mrb[0].mxu0 %v815
    %v921 = vpop.f32.mrb[0].mxu0
    %v922 = vadd.f32 %v837, %v921
    %v923 = vpop.f32.mrb[0].mxu0
    %v924 = vpop.f32.mrb[0].mxu0
    %v925 = vpop.f32.mrb[0].mxu0
    %926 = vdwg.mxu0
    %v927 = vmul.f32 %v126, 0.05
    %v928 = vadd.f32 %v922, %v927
    %v929 = vpack.c.bf16 %v928, %v928
    %v930 = vld [vmem:[#allocation10] sm:$0xf]
    %v931 = vld [vmem:[#allocation10 + $0x4] sm:$0xf]
    %v932 = vld [vmem:[#allocation10 + $0x8] sm:$0xf]
    %v933 = vld [vmem:[#allocation10 + $0xc] sm:$0xf]
    %v934 = vld [vmem:[#allocation10 + $0x10] sm:$0xf]
    %v935 = vld [vmem:[#allocation10 + $0x14] sm:$0xf]
    %v936 = vld [vmem:[#allocation10 + $0x18] sm:$0xf]
    %v937 = vld [vmem:[#allocation10 + $0x1c] sm:$0xf]
    %v938 = vld [vmem:[#allocation10 + $0x20] sm:$0xf]
    %v939 = vld [vmem:[#allocation10 + $0x24] sm:$0xf]
    %v940 = vld [vmem:[#allocation10 + $0x28] sm:$0xf]
    %v941 = vld [vmem:[#allocation10 + $0x2c] sm:$0xf]
    %v942 = vld [vmem:[#allocation10 + $0x30] sm:$0xf]
    %v943 = vld [vmem:[#allocation10 + $0x34] sm:$0xf]
    %v944 = vld [vmem:[#allocation10 + $0x38] sm:$0xf]
    %v945 = vld [vmem:[#allocation10 + $0x3c] sm:$0xf]
    %v946 = vld [vmem:[%s7] sm:$0x1]
    %v948 = vlaneseq
    %v949 = vshrl.u32 %v948, 7
    %v950 = vsub.s32 0, %v949
    %v951 = vrot.slane %v946, %v950
    %v969 = vunpack.c.l.b16 %v930
    %v970 = vunpack.c.l.b16 %v931
    %v971 = vunpack.c.l.b16 %v932
    %v972 = vunpack.c.l.b16 %v933
    %v973 = vunpack.c.l.b16 %v934
    %v974 = vunpack.c.l.b16 %v935
    %v975 = vunpack.c.l.b16 %v936
    %v976 = vunpack.c.l.b16 %v937
    %v977 = vunpack.c.l.b16 %v938
    %v978 = vunpack.c.l.b16 %v939
    %v979 = vunpack.c.l.b16 %v940
    %v980 = vunpack.c.l.b16 %v941
    %v981 = vunpack.c.l.b16 %v942
    %v982 = vunpack.c.l.b16 %v943
    %v983 = vunpack.c.l.b16 %v944
    %v984 = vunpack.c.l.b16 %v945
    %v985 = vpack.c.b16 %v970, %v969
    %v986 = vpack.c.b16 %v972, %v971
    %v987 = vpack.c.b16 %v974, %v973
    %v988 = vpack.c.b16 %v976, %v975
    %v989 = vpack.c.b16 %v978, %v977
    %v990 = vpack.c.b16 %v980, %v979
    %v991 = vpack.c.b16 %v982, %v981
    %v992 = vpack.c.b16 %v984, %v983
    %1001 = vmatprep.subr.bf16.mxu0 0
    %1002 = vmatpush1.bf16.msra.mxu0 %v985
    %1003 = vmatprep.subr.bf16.mxu0 0
    %1004 = vmatpush1.bf16.msra.mxu0 %v986
    %1005 = vmatprep.subr.bf16.mxu0 0
    %1006 = vmatpush1.bf16.msra.mxu0 %v987
    %1007 = vmatprep.subr.bf16.mxu0 0
    %1008 = vmatpush1.bf16.msra.mxu0 %v988
    %1009 = vmatprep.subr.bf16.mxu0 0
    %1010 = vmatpush1.bf16.msra.mxu0 %v989
    %1011 = vmatprep.subr.bf16.mxu0 0
    %1012 = vmatpush1.bf16.msra.mxu0 %v990
    %1013 = vmatprep.subr.bf16.mxu0 0
    %1014 = vmatpush1.bf16.msra.mxu0 %v991
    %1015 = vmatprep.subr.bf16.mxu0 0
    %1016 = vmatpush1.bf16.msra.mxu0 %v992
    %1017 = vmatprep.subr.bf16.mxu0 0
    %1018 = vmatpush1.bf16.msra.mxu0 0
    %1019 = vmatprep.subr.bf16.mxu0 0
    %1020 = vmatpush1.bf16.msra.mxu0 0
    %1021 = vmatprep.subr.bf16.mxu0 0
    %1022 = vmatpush1.bf16.msra.mxu0 0
    %1023 = vmatprep.subr.bf16.mxu0 0
    %1024 = vmatpush1.bf16.msra.mxu0 0
    %1025 = vmatprep.subr.bf16.mxu0 0
    %1026 = vmatpush1.bf16.msra.mxu0 0
    %1027 = vmatprep.subr.bf16.mxu0 0
    %1028 = vmatpush1.bf16.msra.mxu0 0
    %1029 = vmatprep.subr.bf16.mxu0 0
    %1030 = vmatpush1.bf16.msra.mxu0 0
    %1031 = vmatprep.subr.bf16.mxu0 0
    %1032 = vmatpush1.bf16.msra.mxu0 0
    %1033 = vmatprep.mubr.bf16.mxu0 0
    %1034 = vmatmul.mubr.bf16.gmra.mrb[0].mxu0 %v929
    %v1035 = vpop.f32.mrb[0].mxu0
    %v1036 = vadd.f32 %v951, %v1035
    %v1037 = vpop.f32.mrb[0].mxu0
    %v1038 = vpop.f32.mrb[0].mxu0
    %v1039 = vpop.f32.mrb[0].mxu0
    %1040 = vdwg.mxu0
    %v1041 = vtanh.pop %v1036
    %v1042 = vpack.c.bf16 %v1041, %v1041
    %v1043 = vld [vmem:[#allocation11] sm:$0xff]
    %v1044 = vld [vmem:[#allocation11 + $0x8] sm:$0xff]
    %v1045 = vld [vmem:[#allocation11 + $0x10] sm:$0xff]
    %v1046 = vld [vmem:[#allocation11 + $0x18] sm:$0xff]
    %v1047 = vld [vmem:[#allocation11 + $0x20] sm:$0xff]
    %v1048 = vld [vmem:[#allocation11 + $0x28] sm:$0xff]
    %v1049 = vld [vmem:[#allocation11 + $0x30] sm:$0xff]
    %v1050 = vld [vmem:[#allocation11 + $0x38] sm:$0xff]
    %v1051 = vld [vmem:[#allocation11 + $0x40] sm:$0xff]
    %v1052 = vld [vmem:[#allocation11 + $0x48] sm:$0xff]
    %v1053 = vld [vmem:[#allocation11 + $0x50] sm:$0xff]
    %v1054 = vld [vmem:[#allocation11 + $0x58] sm:$0xff]
    %v1055 = vld [vmem:[#allocation11 + $0x60] sm:$0xff]
    %v1056 = vld [vmem:[#allocation11 + $0x68] sm:$0xff]
    %v1057 = vld [vmem:[#allocation11 + $0x70] sm:$0xff]
    %v1058 = vld [vmem:[#allocation11 + $0x78] sm:$0xff]
    %v1059 = vld [vmem:[#allocation11 + $0x80] sm:$0xff]
    %v1060 = vld [vmem:[#allocation11 + $0x88] sm:$0xff]
    %v1061 = vld [vmem:[#allocation11 + $0x90] sm:$0xff]
    %v1062 = vld [vmem:[#allocation11 + $0x98] sm:$0xff]
    %v1063 = vld [vmem:[#allocation11 + $0xa0] sm:$0xff]
    %v1064 = vld [vmem:[#allocation11 + $0xa8] sm:$0xff]
    %v1065 = vld [vmem:[#allocation11 + $0xb0] sm:$0xff]
    %v1066 = vld [vmem:[#allocation11 + $0xb8] sm:$0xff]
    %v1067 = vld [vmem:[#allocation11 + $0xc0] sm:$0xff]
    %v1068 = vld [vmem:[#allocation11 + $0xc8] sm:$0xff]
    %v1069 = vld [vmem:[#allocation11 + $0xd0] sm:$0xff]
    %v1070 = vld [vmem:[#allocation11 + $0xd8] sm:$0xff]
    %v1071 = vld [vmem:[#allocation11 + $0xe0] sm:$0xff]
    %v1072 = vld [vmem:[#allocation11 + $0xe8] sm:$0xff]
    %v1073 = vld [vmem:[#allocation11 + $0xf0] sm:$0xff]
    %v1074 = vld [vmem:[#allocation11 + $0xf8] sm:$0xff]
    %v1075 = vld [vmem:[#allocation11 + $0x100] sm:$0xff]
    %v1076 = vld [vmem:[#allocation11 + $0x108] sm:$0xff]
    %v1077 = vld [vmem:[#allocation11 + $0x110] sm:$0xff]
    %v1078 = vld [vmem:[#allocation11 + $0x118] sm:$0xff]
    %v1079 = vld [vmem:[#allocation11 + $0x120] sm:$0xff]
    %v1080 = vld [vmem:[#allocation11 + $0x128] sm:$0xff]
    %v1081 = vld [vmem:[#allocation11 + $0x130] sm:$0xff]
    %v1082 = vld [vmem:[#allocation11 + $0x138] sm:$0xff]
    %v1083 = vld [vmem:[#allocation11 + $0x140] sm:$0xff]
    %v1084 = vld [vmem:[#allocation11 + $0x148] sm:$0xff]
    %v1085 = vld [vmem:[#allocation11 + $0x150] sm:$0xff]
    %v1086 = vld [vmem:[#allocation11 + $0x158] sm:$0xff]
    %v1087 = vld [vmem:[#allocation11 + $0x160] sm:$0xff]
    %v1088 = vld [vmem:[#allocation11 + $0x168] sm:$0xff]
    %v1089 = vld [vmem:[#allocation11 + $0x170] sm:$0xff]
    %v1090 = vld [vmem:[#allocation11 + $0x178] sm:$0xff]
    %v1091 = vld [vmem:[#allocation11 + $0x180] sm:$0xff]
    %v1092 = vld [vmem:[#allocation11 + $0x188] sm:$0xff]
    %v1093 = vld [vmem:[#allocation11 + $0x190] sm:$0xff]
    %v1094 = vld [vmem:[#allocation11 + $0x198] sm:$0xff]
    %v1095 = vld [vmem:[#allocation11 + $0x1a0] sm:$0xff]
    %v1096 = vld [vmem:[#allocation11 + $0x1a8] sm:$0xff]
    %v1097 = vld [vmem:[#allocation11 + $0x1b0] sm:$0xff]
    %v1098 = vld [vmem:[#allocation11 + $0x1b8] sm:$0xff]
    %v1099 = vld [vmem:[#allocation11 + $0x1c0] sm:$0xff]
    %v1100 = vld [vmem:[#allocation11 + $0x1c8] sm:$0xff]
    %v1101 = vld [vmem:[#allocation11 + $0x1d0] sm:$0xff]
    %v1102 = vld [vmem:[#allocation11 + $0x1d8] sm:$0xff]
    %v1103 = vld [vmem:[#allocation11 + $0x1e0] sm:$0xff]
    %v1104 = vld [vmem:[#allocation11 + $0x1e8] sm:$0xff]
    %v1105 = vld [vmem:[#allocation11 + $0x1f0] sm:$0xff]
    %v1106 = vld [vmem:[#allocation11 + $0x1f8] sm:$0xff]
    %v1107 = vld [vmem:[%s9] sm:$0xff]
    %v1109 = vlaneseq
    %v1110 = vshrl.u32 %v1109, 7
    %v1111 = vsub.s32 0, %v1110
    %v1112 = vrot.slane %v1107, %v1111
    %v1113 = vlaneseq
    %v1114 = vshrl.u32 %v1113, 7
    %v1115 = vsub.s32 1, %v1114
    %v1116 = vrot.slane %v1107, %v1115
    %v1117 = vlaneseq
    %v1118 = vshrl.u32 %v1117, 7
    %v1119 = vsub.s32 2, %v1118
    %v1120 = vrot.slane %v1107, %v1119
    %v1121 = vlaneseq
    %v1122 = vshrl.u32 %v1121, 7
    %v1123 = vsub.s32 3, %v1122
    %v1124 = vrot.slane %v1107, %v1123
    %v1125 = vlaneseq
    %v1126 = vshrl.u32 %v1125, 7
    %v1127 = vsub.s32 4, %v1126
    %v1128 = vrot.slane %v1107, %v1127
    %v1129 = vlaneseq
    %v1130 = vshrl.u32 %v1129, 7
    %v1131 = vsub.s32 5, %v1130
    %v1132 = vrot.slane %v1107, %v1131
    %v1133 = vlaneseq
    %v1134 = vshrl.u32 %v1133, 7
    %v1135 = vsub.s32 6, %v1134
    %v1136 = vrot.slane %v1107, %v1135
    %v1137 = vlaneseq
    %v1138 = vshrl.u32 %v1137, 7
    %v1139 = vsub.s32 7, %v1138
    %v1140 = vrot.slane %v1107, %v1139
    %v1213 = vunpack.c.l.b16 %v1043
    %v1214 = vunpack.c.h.b16 %v1043
    %v1215 = vunpack.c.l.b16 %v1044
    %v1216 = vunpack.c.h.b16 %v1044
    %v1217 = vunpack.c.l.b16 %v1045
    %v1218 = vunpack.c.h.b16 %v1045
    %v1219 = vunpack.c.l.b16 %v1046
    %v1220 = vunpack.c.h.b16 %v1046
    %v1221 = vunpack.c.l.b16 %v1047
    %v1222 = vunpack.c.h.b16 %v1047
    %v1223 = vunpack.c.l.b16 %v1048
    %v1224 = vunpack.c.h.b16 %v1048
    %v1225 = vunpack.c.l.b16 %v1049
    %v1226 = vunpack.c.h.b16 %v1049
    %v1227 = vunpack.c.l.b16 %v1050
    %v1228 = vunpack.c.h.b16 %v1050
    %v1229 = vunpack.c.l.b16 %v1051
    %v1230 = vunpack.c.h.b16 %v1051
    %v1231 = vunpack.c.l.b16 %v1052
    %v1232 = vunpack.c.h.b16 %v1052
    %v1233 = vunpack.c.l.b16 %v1053
    %v1234 = vunpack.c.h.b16 %v1053
    %v1235 = vunpack.c.l.b16 %v1054
    %v1236 = vunpack.c.h.b16 %v1054
    %v1237 = vunpack.c.l.b16 %v1055
    %v1238 = vunpack.c.h.b16 %v1055
    %v1239 = vunpack.c.l.b16 %v1056
    %v1240 = vunpack.c.h.b16 %v1056
    %v1241 = vunpack.c.l.b16 %v1057
    %v1242 = vunpack.c.h.b16 %v1057
    %v1243 = vunpack.c.l.b16 %v1058
    %v1244 = vunpack.c.h.b16 %v1058
    %v1245 = vunpack.c.l.b16 %v1059
    %v1246 = vunpack.c.h.b16 %v1059
    %v1247 = vunpack.c.l.b16 %v1060
    %v1248 = vunpack.c.h.b16 %v1060
    %v1249 = vunpack.c.l.b16 %v1061
    %v1250 = vunpack.c.h.b16 %v1061
    %v1251 = vunpack.c.l.b16 %v1062
    %v1252 = vunpack.c.h.b16 %v1062
    %v1253 = vunpack.c.l.b16 %v1063
    %v1254 = vunpack.c.h.b16 %v1063
    %v1255 = vunpack.c.l.b16 %v1064
    %v1256 = vunpack.c.h.b16 %v1064
    %v1257 = vunpack.c.l.b16 %v1065
    %v1258 = vunpack.c.h.b16 %v1065
    %v1259 = vunpack.c.l.b16 %v1066
    %v1260 = vunpack.c.h.b16 %v1066
    %v1261 = vunpack.c.l.b16 %v1067
    %v1262 = vunpack.c.h.b16 %v1067
    %v1263 = vunpack.c.l.b16 %v1068
    %v1264 = vunpack.c.h.b16 %v1068
    %v1265 = vunpack.c.l.b16 %v1069
    %v1266 = vunpack.c.h.b16 %v1069
    %v1267 = vunpack.c.l.b16 %v1070
    %v1268 = vunpack.c.h.b16 %v1070
    %v1269 = vunpack.c.l.b16 %v1071
    %v1270 = vunpack.c.h.b16 %v1071
    %v1271 = vunpack.c.l.b16 %v1072
    %v1272 = vunpack.c.h.b16 %v1072
    %v1273 = vunpack.c.l.b16 %v1073
    %v1274 = vunpack.c.h.b16 %v1073
    %v1275 = vunpack.c.l.b16 %v1074
    %v1276 = vunpack.c.h.b16 %v1074
    %v1277 = vunpack.c.l.b16 %v1075
    %v1278 = vunpack.c.h.b16 %v1075
    %v1279 = vunpack.c.l.b16 %v1076
    %v1280 = vunpack.c.h.b16 %v1076
    %v1281 = vunpack.c.l.b16 %v1077
    %v1282 = vunpack.c.h.b16 %v1077
    %v1283 = vunpack.c.l.b16 %v1078
    %v1284 = vunpack.c.h.b16 %v1078
    %v1285 = vunpack.c.l.b16 %v1079
    %v1286 = vunpack.c.h.b16 %v1079
    %v1287 = vunpack.c.l.b16 %v1080
    %v1288 = vunpack.c.h.b16 %v1080
    %v1289 = vunpack.c.l.b16 %v1081
    %v1290 = vunpack.c.h.b16 %v1081
    %v1291 = vunpack.c.l.b16 %v1082
    %v1292 = vunpack.c.h.b16 %v1082
    %v1293 = vunpack.c.l.b16 %v1083
    %v1294 = vunpack.c.h.b16 %v1083
    %v1295 = vunpack.c.l.b16 %v1084
    %v1296 = vunpack.c.h.b16 %v1084
    %v1297 = vunpack.c.l.b16 %v1085
    %v1298 = vunpack.c.h.b16 %v1085
    %v1299 = vunpack.c.l.b16 %v1086
    %v1300 = vunpack.c.h.b16 %v1086
    %v1301 = vunpack.c.l.b16 %v1087
    %v1302 = vunpack.c.h.b16 %v1087
    %v1303 = vunpack.c.l.b16 %v1088
    %v1304 = vunpack.c.h.b16 %v1088
    %v1305 = vunpack.c.l.b16 %v1089
    %v1306 = vunpack.c.h.b16 %v1089
    %v1307 = vunpack.c.l.b16 %v1090
    %v1308 = vunpack.c.h.b16 %v1090
    %v1309 = vunpack.c.l.b16 %v1091
    %v1310 = vunpack.c.h.b16 %v1091
    %v1311 = vunpack.c.l.b16 %v1092
    %v1312 = vunpack.c.h.b16 %v1092
    %v1313 = vunpack.c.l.b16 %v1093
    %v1314 = vunpack.c.h.b16 %v1093
    %v1315 = vunpack.c.l.b16 %v1094
    %v1316 = vunpack.c.h.b16 %v1094
    %v1317 = vunpack.c.l.b16 %v1095
    %v1318 = vunpack.c.h.b16 %v1095
    %v1319 = vunpack.c.l.b16 %v1096
    %v1320 = vunpack.c.h.b16 %v1096
    %v1321 = vunpack.c.l.b16 %v1097
    %v1322 = vunpack.c.h.b16 %v1097
    %v1323 = vunpack.c.l.b16 %v1098
    %v1324 = vunpack.c.h.b16 %v1098
    %v1325 = vunpack.c.l.b16 %v1099
    %v1326 = vunpack.c.h.b16 %v1099
    %v1327 = vunpack.c.l.b16 %v1100
    %v1328 = vunpack.c.h.b16 %v1100
    %v1329 = vunpack.c.l.b16 %v1101
    %v1330 = vunpack.c.h.b16 %v1101
    %v1331 = vunpack.c.l.b16 %v1102
    %v1332 = vunpack.c.h.b16 %v1102
    %v1333 = vunpack.c.l.b16 %v1103
    %v1334 = vunpack.c.h.b16 %v1103
    %v1335 = vunpack.c.l.b16 %v1104
    %v1336 = vunpack.c.h.b16 %v1104
    %v1337 = vunpack.c.l.b16 %v1105
    %v1338 = vunpack.c.h.b16 %v1105
    %v1339 = vunpack.c.l.b16 %v1106
    %v1340 = vunpack.c.h.b16 %v1106
    %v1341 = vpack.c.b16 %v1221, %v1213
    %v1342 = vpack.c.b16 %v1222, %v1214
    %v1343 = vpack.c.b16 %v1223, %v1215
    %v1344 = vpack.c.b16 %v1224, %v1216
    %v1345 = vpack.c.b16 %v1225, %v1217
    %v1346 = vpack.c.b16 %v1226, %v1218
    %v1347 = vpack.c.b16 %v1227, %v1219
    %v1348 = vpack.c.b16 %v1228, %v1220
    %v1349 = vpack.c.b16 %v1237, %v1229
    %v1350 = vpack.c.b16 %v1238, %v1230
    %v1351 = vpack.c.b16 %v1239, %v1231
    %v1352 = vpack.c.b16 %v1240, %v1232
    %v1353 = vpack.c.b16 %v1241, %v1233
    %v1354 = vpack.c.b16 %v1242, %v1234
    %v1355 = vpack.c.b16 %v1243, %v1235
    %v1356 = vpack.c.b16 %v1244, %v1236
    %v1357 = vpack.c.b16 %v1253, %v1245
    %v1358 = vpack.c.b16 %v1254, %v1246
    %v1359 = vpack.c.b16 %v1255, %v1247
    %v1360 = vpack.c.b16 %v1256, %v1248
    %v1361 = vpack.c.b16 %v1257, %v1249
    %v1362 = vpack.c.b16 %v1258, %v1250
    %v1363 = vpack.c.b16 %v1259, %v1251
    %v1364 = vpack.c.b16 %v1260, %v1252
    %v1365 = vpack.c.b16 %v1269, %v1261
    %v1366 = vpack.c.b16 %v1270, %v1262
    %v1367 = vpack.c.b16 %v1271, %v1263
    %v1368 = vpack.c.b16 %v1272, %v1264
    %v1369 = vpack.c.b16 %v1273, %v1265
    %v1370 = vpack.c.b16 %v1274, %v1266
    %v1371 = vpack.c.b16 %v1275, %v1267
    %v1372 = vpack.c.b16 %v1276, %v1268
    %v1373 = vpack.c.b16 %v1285, %v1277
    %v1374 = vpack.c.b16 %v1286, %v1278
    %v1375 = vpack.c.b16 %v1287, %v1279
    %v1376 = vpack.c.b16 %v1288, %v1280
    %v1377 = vpack.c.b16 %v1289, %v1281
    %v1378 = vpack.c.b16 %v1290, %v1282
    %v1379 = vpack.c.b16 %v1291, %v1283
    %v1380 = vpack.c.b16 %v1292, %v1284
    %v1381 = vpack.c.b16 %v1301, %v1293
    %v1382 = vpack.c.b16 %v1302, %v1294
    %v1383 = vpack.c.b16 %v1303, %v1295
    %v1384 = vpack.c.b16 %v1304, %v1296
    %v1385 = vpack.c.b16 %v1305, %v1297
    %v1386 = vpack.c.b16 %v1306, %v1298
    %v1387 = vpack.c.b16 %v1307, %v1299
    %v1388 = vpack.c.b16 %v1308, %v1300
    %v1389 = vpack.c.b16 %v1317, %v1309
    %v1390 = vpack.c.b16 %v1318, %v1310
    %v1391 = vpack.c.b16 %v1319, %v1311
    %v1392 = vpack.c.b16 %v1320, %v1312
    %v1393 = vpack.c.b16 %v1321, %v1313
    %v1394 = vpack.c.b16 %v1322, %v1314
    %v1395 = vpack.c.b16 %v1323, %v1315
    %v1396 = vpack.c.b16 %v1324, %v1316
    %v1397 = vpack.c.b16 %v1333, %v1325
    %v1398 = vpack.c.b16 %v1334, %v1326
    %v1399 = vpack.c.b16 %v1335, %v1327
    %v1400 = vpack.c.b16 %v1336, %v1328
    %v1401 = vpack.c.b16 %v1337, %v1329
    %v1402 = vpack.c.b16 %v1338, %v1330
    %v1403 = vpack.c.b16 %v1339, %v1331
    %v1404 = vpack.c.b16 %v1340, %v1332
    %1469 = vmatprep.subr.bf16.mxu0 %v1342
    %1470 = vmatpush1.bf16.msra.mxu0 %v1341
    %1471 = vmatprep.subr.bf16.mxu0 %v1350
    %1472 = vmatpush1.bf16.msra.mxu0 %v1349
    %1473 = vmatprep.subr.bf16.mxu0 %v1358
    %1474 = vmatpush1.bf16.msra.mxu0 %v1357
    %1475 = vmatprep.subr.bf16.mxu0 %v1366
    %1476 = vmatpush1.bf16.msra.mxu0 %v1365
    %1477 = vmatprep.subr.bf16.mxu0 %v1374
    %1478 = vmatpush1.bf16.msra.mxu0 %v1373
    %1479 = vmatprep.subr.bf16.mxu0 %v1382
    %1480 = vmatpush1.bf16.msra.mxu0 %v1381
    %1481 = vmatprep.subr.bf16.mxu0 %v1390
    %1482 = vmatpush1.bf16.msra.mxu0 %v1389
    %1483 = vmatprep.subr.bf16.mxu0 %v1398
    %1484 = vmatpush1.bf16.msra.mxu0 %v1397
    %1485 = vmatprep.subr.bf16.mxu0 0
    %1486 = vmatpush1.bf16.msra.mxu0 0
    %1487 = vmatprep.subr.bf16.mxu0 0
    %1488 = vmatpush1.bf16.msra.mxu0 0
    %1489 = vmatprep.subr.bf16.mxu0 0
    %1490 = vmatpush1.bf16.msra.mxu0 0
    %1491 = vmatprep.subr.bf16.mxu0 0
    %1492 = vmatpush1.bf16.msra.mxu0 0
    %1493 = vmatprep.subr.bf16.mxu0 0
    %1494 = vmatpush1.bf16.msra.mxu0 0
    %1495 = vmatprep.subr.bf16.mxu0 0
    %1496 = vmatpush1.bf16.msra.mxu0 0
    %1497 = vmatprep.subr.bf16.mxu0 0
    %1498 = vmatpush1.bf16.msra.mxu0 0
    %1499 = vmatprep.subr.bf16.mxu0 0
    %1500 = vmatpush1.bf16.msra.mxu0 0
    %1501 = vmatprep.mubr.bf16.mxu0 0
    %1502 = vmatmul.mubr.bf16.gmra.mrb[0].mxu0 %v1042
    %v1503 = vpop.f32.mrb[0].mxu0
    %v1504 = vadd.f32 %v1112, %v1503
    %v1505 = vpop.f32.mrb[0].mxu0
    %v1506 = vadd.f32 %v1116, %v1505
    %v1507 = vpop.f32.mrb[0].mxu0
    %v1508 = vpop.f32.mrb[0].mxu0
    %1509 = vdwg.mxu0
    %1510 = vmatprep.subr.bf16.mxu0 %v1344
    %1511 = vmatpush1.bf16.msra.mxu0 %v1343
    %1512 = vmatprep.subr.bf16.mxu0 %v1352
    %1513 = vmatpush1.bf16.msra.mxu0 %v1351
    %1514 = vmatprep.subr.bf16.mxu0 %v1360
    %1515 = vmatpush1.bf16.msra.mxu0 %v1359
    %1516 = vmatprep.subr.bf16.mxu0 %v1368
    %1517 = vmatpush1.bf16.msra.mxu0 %v1367
    %1518 = vmatprep.subr.bf16.mxu0 %v1376
    %1519 = vmatpush1.bf16.msra.mxu0 %v1375
    %1520 = vmatprep.subr.bf16.mxu0 %v1384
    %1521 = vmatpush1.bf16.msra.mxu0 %v1383
    %1522 = vmatprep.subr.bf16.mxu0 %v1392
    %1523 = vmatpush1.bf16.msra.mxu0 %v1391
    %1524 = vmatprep.subr.bf16.mxu0 %v1400
    %1525 = vmatpush1.bf16.msra.mxu0 %v1399
    %1526 = vmatprep.subr.bf16.mxu0 0
    %1527 = vmatpush1.bf16.msra.mxu0 0
    %1528 = vmatprep.subr.bf16.mxu0 0
    %1529 = vmatpush1.bf16.msra.mxu0 0
    %1530 = vmatprep.subr.bf16.mxu0 0
    %1531 = vmatpush1.bf16.msra.mxu0 0
    %1532 = vmatprep.subr.bf16.mxu0 0
    %1533 = vmatpush1.bf16.msra.mxu0 0
    %1534 = vmatprep.subr.bf16.mxu0 0
    %1535 = vmatpush1.bf16.msra.mxu0 0
    %1536 = vmatprep.subr.bf16.mxu0 0
    %1537 = vmatpush1.bf16.msra.mxu0 0
    %1538 = vmatprep.subr.bf16.mxu0 0
    %1539 = vmatpush1.bf16.msra.mxu0 0
    %1540 = vmatprep.subr.bf16.mxu0 0
    %1541 = vmatpush1.bf16.msra.mxu0 0
    %1542 = vmatprep.mubr.bf16.mxu0 0
    %1543 = vmatmul.mubr.bf16.gmra.mrb[0].mxu0 %v1042
    %v1544 = vpop.f32.mrb[0].mxu0
    %v1545 = vadd.f32 %v1120, %v1544
    %v1546 = vpop.f32.mrb[0].mxu0
    %v1547 = vadd.f32 %v1124, %v1546
    %v1548 = vpop.f32.mrb[0].mxu0
    %v1549 = vpop.f32.mrb[0].mxu0
    %1550 = vdwg.mxu0
    %1551 = vmatprep.subr.bf16.mxu0 %v1346
    %1552 = vmatpush1.bf16.msra.mxu0 %v1345
    %1553 = vmatprep.subr.bf16.mxu0 %v1354
    %1554 = vmatpush1.bf16.msra.mxu0 %v1353
    %1555 = vmatprep.subr.bf16.mxu0 %v1362
    %1556 = vmatpush1.bf16.msra.mxu0 %v1361
    %1557 = vmatprep.subr.bf16.mxu0 %v1370
    %1558 = vmatpush1.bf16.msra.mxu0 %v1369
    %1559 = vmatprep.subr.bf16.mxu0 %v1378
    %1560 = vmatpush1.bf16.msra.mxu0 %v1377
    %1561 = vmatprep.subr.bf16.mxu0 %v1386
    %1562 = vmatpush1.bf16.msra.mxu0 %v1385
    %1563 = vmatprep.subr.bf16.mxu0 %v1394
    %1564 = vmatpush1.bf16.msra.mxu0 %v1393
    %1565 = vmatprep.subr.bf16.mxu0 %v1402
    %1566 = vmatpush1.bf16.msra.mxu0 %v1401
    %1567 = vmatprep.subr.bf16.mxu0 0
    %1568 = vmatpush1.bf16.msra.mxu0 0
    %1569 = vmatprep.subr.bf16.mxu0 0
    %1570 = vmatpush1.bf16.msra.mxu0 0
    %1571 = vmatprep.subr.bf16.mxu0 0
    %1572 = vmatpush1.bf16.msra.mxu0 0
    %1573 = vmatprep.subr.bf16.mxu0 0
    %1574 = vmatpush1.bf16.msra.mxu0 0
    %1575 = vmatprep.subr.bf16.mxu0 0
    %1576 = vmatpush1.bf16.msra.mxu0 0
    %1577 = vmatprep.subr.bf16.mxu0 0
    %1578 = vmatpush1.bf16.msra.mxu0 0
    %1579 = vmatprep.subr.bf16.mxu0 0
    %1580 = vmatpush1.bf16.msra.mxu0 0
    %1581 = vmatprep.subr.bf16.mxu0 0
    %1582 = vmatpush1.bf16.msra.mxu0 0
    %1583 = vmatprep.mubr.bf16.mxu0 0
    %1584 = vmatmul.mubr.bf16.gmra.mrb[0].mxu0 %v1042
    %v1585 = vpop.f32.mrb[0].mxu0
    %v1586 = vadd.f32 %v1128, %v1585
    %v1587 = vpop.f32.mrb[0].mxu0
    %v1588 = vadd.f32 %v1132, %v1587
    %v1589 = vpop.f32.mrb[0].mxu0
    %v1590 = vpop.f32.mrb[0].mxu0
    %1591 = vdwg.mxu0
    %1592 = vmatprep.subr.bf16.mxu0 %v1348
    %1593 = vmatpush1.bf16.msra.mxu0 %v1347
    %1594 = vmatprep.subr.bf16.mxu0 %v1356
    %1595 = vmatpush1.bf16.msra.mxu0 %v1355
    %1596 = vmatprep.subr.bf16.mxu0 %v1364
    %1597 = vmatpush1.bf16.msra.mxu0 %v1363
    %1598 = vmatprep.subr.bf16.mxu0 %v1372
    %1599 = vmatpush1.bf16.msra.mxu0 %v1371
    %1600 = vmatprep.subr.bf16.mxu0 %v1380
    %1601 = vmatpush1.bf16.msra.mxu0 %v1379
    %1602 = vmatprep.subr.bf16.mxu0 %v1388
    %1603 = vmatpush1.bf16.msra.mxu0 %v1387
    %1604 = vmatprep.subr.bf16.mxu0 %v1396
    %1605 = vmatpush1.bf16.msra.mxu0 %v1395
    %1606 = vmatprep.subr.bf16.mxu0 %v1404
    %1607 = vmatpush1.bf16.msra.mxu0 %v1403
    %1608 = vmatprep.subr.bf16.mxu0 0
    %1609 = vmatpush1.bf16.msra.mxu0 0
    %1610 = vmatprep.subr.bf16.mxu0 0
    %1611 = vmatpush1.bf16.msra.mxu0 0
    %1612 = vmatprep.subr.bf16.mxu0 0
    %1613 = vmatpush1.bf16.msra.mxu0 0
    %1614 = vmatprep.subr.bf16.mxu0 0
    %1615 = vmatpush1.bf16.msra.mxu0 0
    %1616 = vmatprep.subr.bf16.mxu0 0
    %1617 = vmatpush1.bf16.msra.mxu0 0
    %1618 = vmatprep.subr.bf16.mxu0 0
    %1619 = vmatpush1.bf16.msra.mxu0 0
    %1620 = vmatprep.subr.bf16.mxu0 0
    %1621 = vmatpush1.bf16.msra.mxu0 0
    %1622 = vmatprep.subr.bf16.mxu0 0
    %1623 = vmatpush1.bf16.msra.mxu0 0
    %1624 = vmatprep.mubr.bf16.mxu0 0
    %1625 = vmatmul.mubr.bf16.gmra.mrb[0].mxu0 %v1042
    %v1626 = vpop.f32.mrb[0].mxu0
    %v1627 = vadd.f32 %v1136, %v1626
    %v1628 = vpop.f32.mrb[0].mxu0
    %v1629 = vadd.f32 %v1140, %v1628
    %v1630 = vpop.f32.mrb[0].mxu0
    %v1631 = vpop.f32.mrb[0].mxu0
    %1632 = vdwg.mxu0
    %v1633 = vlaneseq
    %v1634 = vshrl.u32 %v1633, 7
    %s1635 = smul.u32 0, 8
    %v1636 = vstv %s1635
    %v1637 = vadd.s32 %v1634, %v1636
    %vm1638 = vcmp.lt.s32.totalorder %v1637, 2
    %v1639 = vsel %vm1638, 1, 0
    %v1640 = vcvt.s32.f32 %v1639
    %v1641 = vsub.f32 %v1504, %v118
    %v1642 = vsub.f32 %v1506, %v119
    %v1643 = vsub.f32 %v1545, %v120
    %v1644 = vsub.f32 %v1547, %v121
    %v1645 = vsub.f32 %v1586, %v122
    %v1646 = vsub.f32 %v1588, %v123
    %v1647 = vsub.f32 %v1627, %v124
    %v1648 = vsub.f32 %v1629, %v125
    %v1649 = vmul.f32 %v1641, %v1640
    %v1650 = vmul.f32 %v1642, %v1640
    %v1651 = vmul.f32 %v1643, %v1640
    %v1652 = vmul.f32 %v1644, %v1640
    %v1653 = vmul.f32 %v1645, %v1640
    %v1654 = vmul.f32 %v1646, %v1640
    %v1655 = vmul.f32 %v1647, %v1640
    %v1656 = vmul.f32 %v1648, %v1640
    %v1657 = vmul.f32 %v1649, %v1649
    %v1658 = vmul.f32 %v1650, %v1650
    %v1659 = vmul.f32 %v1651, %v1651
    %v1660 = vmul.f32 %v1652, %v1652
    %v1661 = vmul.f32 %v1653, %v1653
    %v1662 = vmul.f32 %v1654, %v1654
    %v1663 = vmul.f32 %v1655, %v1655
    %v1664 = vmul.f32 %v1656, %v1656
    %v1665 = vadd.f32 %v1657, %v1658
    %v1666 = vadd.f32 %v1665, %v1659
    %v1667 = vadd.f32 %v1666, %v1660
    %v1668 = vadd.f32 %v1667, %v1661
    %v1669 = vadd.f32 %v1668, %v1662
    %v1670 = vadd.f32 %v1669, %v1663
    %v1671 = vadd.f32 %v1670, %v1664
    %1672 = vadd.xlane.f32.xlu0 %v1671
    %v1673 = vpop.xlane.xlu0 %1672
    %v1674 = vrot.slane %v1673, 4
    %v1675 = vadd.f32 %v1673, %v1674
    %v1676 = vrot.slane %v1675, 2
    %v1677 = vadd.f32 %v1675, %v1676
    %v1678 = vrot.slane %v1677, 1
    %v1679 = vadd.f32 %v1677, %v1678
    %s1680 = vtos %v1679
    %v1681 = vmul.f32 %v1504, 0.5
    %v1682 = vmul.f32 %v1506, 0.5
    %v1683 = vmul.f32 %v1545, 0.5
    %v1684 = vmul.f32 %v1547, 0.5
    %v1685 = vmul.f32 %v1586, 0.5
    %v1686 = vmul.f32 %v1588, 0.5
    %v1687 = vmul.f32 %v1627, 0.5
    %v1688 = vmul.f32 %v1629, 0.5
    %v1689 = vtanh.pop %v1681
    %v1690 = vtanh.pop %v1682
    %v1691 = vtanh.pop %v1683
    %v1692 = vtanh.pop %v1684
    %v1693 = vtanh.pop %v1685
    %v1694 = vtanh.pop %v1686
    %v1695 = vtanh.pop %v1687
    %v1696 = vtanh.pop %v1688
    %v1697 = vmul.f32 %v1689, 0.5
    %v1698 = vmul.f32 %v1690, 0.5
    %v1699 = vmul.f32 %v1691, 0.5
    %v1700 = vmul.f32 %v1692, 0.5
    %v1701 = vmul.f32 %v1693, 0.5
    %v1702 = vmul.f32 %v1694, 0.5
    %v1703 = vmul.f32 %v1695, 0.5
    %v1704 = vmul.f32 %v1696, 0.5
    %v1705 = vadd.f32 %v1697, 0.5
    %v1706 = vadd.f32 %v1698, 0.5
    %v1707 = vadd.f32 %v1699, 0.5
    %v1708 = vadd.f32 %v1700, 0.5
    %v1709 = vadd.f32 %v1701, 0.5
    %v1710 = vadd.f32 %v1702, 0.5
    %v1711 = vadd.f32 %v1703, 0.5
    %v1712 = vadd.f32 %v1704, 0.5
    %1713 = vst [vmem:[#allocation13] sm:$0xff] %v1705
    %1714 = vst [vmem:[#allocation13 + $0x8] sm:$0xff] %v1706
    %1715 = vst [vmem:[#allocation13 + $0x10] sm:$0xff] %v1707
    %1716 = vst [vmem:[#allocation13 + $0x18] sm:$0xff] %v1708
    %1717 = vst [vmem:[#allocation13 + $0x20] sm:$0xff] %v1709
    %1718 = vst [vmem:[#allocation13 + $0x28] sm:$0xff] %v1710
    %1719 = vst [vmem:[#allocation13 + $0x30] sm:$0xff] %v1711
    %1720 = vst [vmem:[#allocation13 + $0x38] sm:$0xff] %v1712
    %v1721 = vsub.f32 %v1705, %v118
    %v1722 = vsub.f32 %v1706, %v119
    %v1723 = vsub.f32 %v1707, %v120
    %v1724 = vsub.f32 %v1708, %v121
    %v1725 = vsub.f32 %v1709, %v122
    %v1726 = vsub.f32 %v1710, %v123
    %v1727 = vsub.f32 %v1711, %v124
    %v1728 = vsub.f32 %v1712, %v125
    %v1729 = vmul.f32 %v1721, %v1640
    %v1730 = vmul.f32 %v1722, %v1640
    %v1731 = vmul.f32 %v1723, %v1640
    %v1732 = vmul.f32 %v1724, %v1640
    %v1733 = vmul.f32 %v1725, %v1640
    %v1734 = vmul.f32 %v1726, %v1640
    %v1735 = vmul.f32 %v1727, %v1640
    %v1736 = vmul.f32 %v1728, %v1640
    %v1737 = vmul.f32 %v1729, %v1729
    %v1738 = vmul.f32 %v1730, %v1730
    %v1739 = vmul.f32 %v1731, %v1731
    %v1740 = vmul.f32 %v1732, %v1732
    %v1741 = vmul.f32 %v1733, %v1733
    %v1742 = vmul.f32 %v1734, %v1734
    %v1743 = vmul.f32 %v1735, %v1735
    %v1744 = vmul.f32 %v1736, %v1736
    %v1745 = vadd.f32 %v1737, %v1738
    %v1746 = vadd.f32 %v1745, %v1739
    %v1747 = vadd.f32 %v1746, %v1740
    %v1748 = vadd.f32 %v1747, %v1741
    %v1749 = vadd.f32 %v1748, %v1742
    %v1750 = vadd.f32 %v1749, %v1743
    %v1751 = vadd.f32 %v1750, %v1744
    %1752 = vadd.xlane.f32.xlu0 %v1751
    %v1753 = vpop.xlane.xlu0 %1752
    %v1754 = vrot.slane %v1753, 4
    %v1755 = vadd.f32 %v1753, %v1754
    %v1756 = vrot.slane %v1755, 2
    %v1757 = vadd.f32 %v1755, %v1756
    %v1758 = vrot.slane %v1757, 1
    %v1759 = vadd.f32 %v1757, %v1758
    %s1760 = vtos %v1759
    %v1761 = vlaneseq
    %v1762 = vand.u32 %v1761, 127
    %vm1763 = vcmp.eq.s32.totalorder %v1634, 0
    %vm1764 = vcmp.eq.s32.totalorder %v1762, 0
    %vm1765 = vmand %vm1763, %vm1764
    %vm1766 = vcmp.eq.s32.totalorder %v1762, 1
    %vm1767 = vmand %vm1763, %vm1766
    %v1768 = vstv %s1760
    %v1769 = vsel %vm1767, %v1768, 0.0
    %v1770 = vstv %s1680
    %v1771 = vsel %vm1765, %v1770, %v1769
    %1772 = vst [vmem:[#allocation14] sm:$0xff] %v1771
    // Predicated region
    $region66: #{tpu_custom_call.1} parent=1 // pred_check
      _
    $region67: #{tpu_custom_call.1} parent=1 // pred_check_branch
      %1774 = sbr.rel (0) target = $region69
    $region68: #{tpu_custom_call.1} parent=1 // pred_region
      %s1776 = ssub.s32 1024, 1024
      %1777 = vsyncadd [#allocation4], %s1776
      %s1779 = sshll.u32 [#allocation13], 4
      %s1780 = int_to_ptr.vmem [resolvable:$true] %s1779
      %1782 = dma.vmem_to_hbm [thread:$0]  %s1780, 1024, %s10, [#allocation4]
    $region69: #{tpu_custom_call.1} parent=1 // pred_fallthru
      _
    // Predicated region
    $region70: #{tpu_custom_call.1} parent=1 // pred_check
      _
    $region71: #{tpu_custom_call.1} parent=1 // pred_check_branch
      %1784 = sbr.rel (0) target = $region73
    $region72: #{tpu_custom_call.1} parent=1 // pred_region
      %s1786 = ssub.s32 128, 128
      %1787 = vsyncadd [#allocation15], %s1786
      %s1789 = sshll.u32 [#allocation14], 4
      %s1790 = int_to_ptr.vmem [resolvable:$true] %s1789
      %1792 = dma.vmem_to_hbm [thread:$0]  %s1790, 128, %s11, [#allocation15]
    $region73: #{tpu_custom_call.1} parent=1 // pred_fallthru
      _
    // Predicated region
    $region74: #{tpu_custom_call.1} parent=1 // pred_check
      _
    $region75: #{tpu_custom_call.1} parent=1 // pred_check_branch
      %1794 = sbr.rel (0) target = $region77
    $region76: #{tpu_custom_call.1} parent=1 // pred_region
      %1795 = dma.done [#allocation4], 1024
    $region77: #{tpu_custom_call.1} parent=1 // pred_fallthru
      _
    // Predicated region
    $region78: #{tpu_custom_call.1} parent=1 // pred_check
      _
    $region79: #{tpu_custom_call.1} parent=1 // pred_check_branch
      %1797 = sbr.rel (0) target = $region81
    $region80: #{tpu_custom_call.1} parent=1 // pred_region
      %1798 = dma.done [#allocation15], 128
    $region81: #{tpu_custom_call.1} parent=1 // pred_fallthru
      _
    %1799 = vsyncpa [#allocation3], 1
    %1800 = vsyncpa [#allocation6], 1
    %1801 = vsyncpa [#allocation9], 1
    %1802 = vsyncpa [#allocation12], 1
    %1803 = vsyncpa [#allocation4], 1
    %1804 = vsyncpa [#allocation15], 1

</llo_original>
